<compile_context>
chip_gen: v5e
topology: v5e:2x2
jax: 0.10.0
libtpu: 0.0.40
codegen_flags: <defaults>
</compile_context>

<pallas_src>
import functools

import jax
import jax.numpy as jnp
from jax.experimental import pallas as pl
from jax.experimental.pallas import tpu as pltpu


def _round_up(x, m):
    return ((x + m - 1) // m) * m


def _initial_contextual_node_kernel(past_ref, future_ref, early_ref, later_ref,
                                    eattr_ref, sfattr_ref,
                                    w1_ref, b1_ref, w2_ref, b2_ref,
                                    out_ref,
                                    acc_fwd, acc_frm, acc_bwd,
                                    *, agg_mode, cnt_f, cnt_fs):
    e = pl.program_id(1)
    n_e = pl.num_programs(1)
    n_tile = out_ref.shape[0]
    e_tile = past_ref.shape[1]

    @pl.when(e == 0)
    def _():
        acc_fwd[...] = jnp.zeros_like(acc_fwd)
        acc_frm[...] = jnp.zeros_like(acc_frm)
        acc_bwd[...] = jnp.zeros_like(acc_bwd)

    # Global node ids covered by this node tile.
    node_ids = (jax.lax.broadcasted_iota(jnp.int32, (n_tile, e_tile), 0)
                + pl.program_id(0) * n_tile)

    # One-hot scatter matrices built directly in the MXU input dtype (bf16).
    # Padded edges carry index -1 and never match, so they contribute nothing.
    oh_dt = jnp.bfloat16
    oh_fwd = (future_ref[...] == node_ids).astype(oh_dt)                 # [Nt, Et]
    oh_bwd = (past_ref[...] == node_ids).astype(oh_dt)                   # [Nt, Et]
    oh_frm = ((early_ref[...] == node_ids).astype(oh_dt)
              + (later_ref[...] == node_ids).astype(oh_dt))              # [Nt, Et]

    ea = eattr_ref[...]      # bf16 [Et, Fa]  (last real column = ones -> count)
    sfa = sfattr_ref[...]    # bf16 [Et, Fsa] (last real column = ones -> count)

    # Scatter-sum on the MXU with f32 accumulation across the E grid axis.
    acc_fwd[...] += jnp.dot(oh_fwd, ea, preferred_element_type=jnp.float32)
    acc_bwd[...] += jnp.dot(oh_bwd, ea, preferred_element_type=jnp.float32)
    acc_frm[...] += jnp.dot(oh_frm, sfa, preferred_element_type=jnp.float32)

    @pl.when(e == n_e - 1)
    def _():
        f_fwd = acc_fwd[...]
        f_frm = acc_frm[...]
        f_bwd = acc_bwd[...]
        if agg_mode == "mean":
            # Counts were accumulated in the ones column (index cnt_f / cnt_fs);
            # clamp to 1 to match torch_scatter's zero-fill for empty nodes.
            inv_fwd = pl.reciprocal(jnp.maximum(f_fwd[:, cnt_f:cnt_f + 1], 1.0),
                                    approx=True)
            inv_bwd = pl.reciprocal(jnp.maximum(f_bwd[:, cnt_f:cnt_f + 1], 1.0),
                                    approx=True)
            inv_frm = pl.reciprocal(jnp.maximum(f_frm[:, cnt_fs:cnt_fs + 1], 1.0),
                                    approx=True)
            f_fwd = f_fwd * inv_fwd
            f_bwd = f_bwd * inv_bwd
            f_frm = f_frm * inv_frm
        # TODO(synk): "max"/"min" node_agg_mode need a masked segment-max, not a
        # one-hot matmul; only "sum"/"mean" are implemented here.

        # flow_total = cat([forward, frame, backward], dim=1) (padded slabs).
        flow = jnp.concatenate([f_fwd, f_frm, f_bwd], axis=1)

        # node_mlp: Linear -> ReLU -> Linear (weights are zero-padded, so the
        # count / padding columns contribute nothing).
        h = jnp.dot(flow, w1_ref[...], preferred_element_type=jnp.float32) + b1_ref[...]
        h = jnp.maximum(h, 0.0)
        o = jnp.dot(h, w2_ref[...], preferred_element_type=jnp.float32) + b2_ref[...]
        out_ref[...] = o.astype(out_ref.dtype)


def initial_contextual_node_model(edge_index, edge_attr, num_nodes,
                                  same_frame_edge_index, same_frame_edge_attr,
                                  params, node_agg_mode="sum",
                                  n_tile=128, e_tile=256):
    """Pallas wrapper.

    edge_index: [2, E] int, edge_attr: [E, F] float,
    same_frame_edge_index: [2, E_sf] int, same_frame_edge_attr: [E_sf, F_sf] float,
    params = (w1 [2F+F_sf, H], b1 [H], w2 [H, O], b2 [O]).

    Tile sizes default to n_tile=128, e_tile=256 which keep the per-step VMEM
    footprint (one-hots + double-buffered bf16 edge tiles + f32 accumulators)
    small enough for v7x's 64 MiB VMEM; raise e_tile on v5e/v6e if desired.
    """
    past = edge_index[0].astype(jnp.int32)
    future = edge_index[1].astype(jnp.int32)
    early = same_frame_edge_index[0].astype(jnp.int32)
    later = same_frame_edge_index[1].astype(jnp.int32)

    E, F = edge_attr.shape
    E_sf, F_sf = same_frame_edge_attr.shape
    w1, b1, w2, b2 = params
    H = w1.shape[1]
    O = w2.shape[1]

    # Lane-dense padded sizes (+1 feature column holds the per-edge "one" that
    # accumulates into the per-node count on the same MXU pass).
    Fa = _round_up(F + 1, 128)
    Fsa = _round_up(F_sf + 1, 128)
    Hp = _round_up(H, 128)
    Op = _round_up(O, 128)
    Np = _round_up(max(num_nodes, 1), n_tile)
    Ep = _round_up(max(E, E_sf, 1), e_tile)

    # --- edge features: append ones column, cast to bf16, zero-pad to [Ep, *]
    def pad_attr(a, e, f, fa):
        aug = jnp.concatenate(
            [a.astype(jnp.float32), jnp.ones((e, 1), jnp.float32)], axis=1)
        out = jnp.zeros((Ep, fa), jnp.bfloat16)
        return out.at[:e, :f + 1].set(aug.astype(jnp.bfloat16))

    ea_p = pad_attr(edge_attr, E, F, Fa)
    sfa_p = pad_attr(same_frame_edge_attr, E_sf, F_sf, Fsa)

    # --- index rows, padded with -1 so padded edges never match any node id
    def pad_idx(x, e):
        out = jnp.full((1, Ep), -1, jnp.int32)
        return out.at[0, :e].set(x)

    past_p = pad_idx(past, E)
    future_p = pad_idx(future, E)
    early_p = pad_idx(early, E_sf)
    later_p = pad_idx(later, E_sf)

    # --- MLP weights, zero-padded to lane-dense shapes; rows corresponding to
    #     the count / padding columns are zero so they do not affect the MLP.
    w1 = w1.astype(jnp.float32)
    w1_fwd, w1_frm, w1_bwd = w1[:F], w1[F:F + F_sf], w1[F + F_sf:]

    def pad_w1_block(w, rows, rows_pad):
        out = jnp.zeros((rows_pad, Hp), jnp.float32)
        return out.at[:rows, :H].set(w)

    w1_p = jnp.concatenate(
        [pad_w1_block(w1_fwd, F, Fa),
         pad_w1_block(w1_frm, F_sf, Fsa),
         pad_w1_block(w1_bwd, F, Fa)], axis=0)                    # [Fa+Fsa+Fa, Hp]
    b1_p = jnp.zeros((1, Hp), jnp.float32).at[0, :H].set(b1.astype(jnp.float32))
    w2_p = jnp.zeros((Hp, Op), jnp.float32).at[:H, :O].set(w2.astype(jnp.float32))
    b2_p = jnp.zeros((1, Op), jnp.float32).at[0, :O].set(b2.astype(jnp.float32))

    grid = (Np // n_tile, Ep // e_tile)

    kernel = functools.partial(_initial_contextual_node_kernel,
                               agg_mode=node_agg_mode, cnt_f=F, cnt_fs=F_sf)

    # TODO(synk): for production graph sizes, bucket/sort edges per node tile and
    # use PrefetchScalarGridSpec so each (N_tile, E_tile) block only sees edges
    # that can hit it (block-sparse E axis) instead of the dense O(N*E*F) scan.
    out = pl.pallas_call(
        kernel,
        out_shape=jax.ShapeDtypeStruct((Np, Op), jnp.float32),
        grid=grid,
        in_specs=[
            pl.BlockSpec((1, e_tile), lambda i, e: (0, e)),             # past ids
            pl.BlockSpec((1, e_tile), lambda i, e: (0, e)),             # future ids
            pl.BlockSpec((1, e_tile), lambda i, e: (0, e)),             # early ids
            pl.BlockSpec((1, e_tile), lambda i, e: (0, e)),             # later ids
            pl.BlockSpec((e_tile, Fa), lambda i, e: (e, 0)),            # edge_attr(+1)
            pl.BlockSpec((e_tile, Fsa), lambda i, e: (e, 0)),           # sf_attr(+1)
            pl.BlockSpec((Fa + Fsa + Fa, Hp), lambda i, e: (0, 0)),     # W1 (resident)
            pl.BlockSpec((1, Hp), lambda i, e: (0, 0)),                 # b1
            pl.BlockSpec((Hp, Op), lambda i, e: (0, 0)),                # W2
            pl.BlockSpec((1, Op), lambda i, e: (0, 0)),                 # b2
        ],
        out_specs=pl.BlockSpec((n_tile, Op), lambda i, e: (i, 0)),
        scratch_shapes=[
            pltpu.VMEM((n_tile, Fa), jnp.float32),    # acc_fwd
            pltpu.VMEM((n_tile, Fsa), jnp.float32),   # acc_frame
            pltpu.VMEM((n_tile, Fa), jnp.float32),    # acc_bwd
        ],
        compiler_params=pltpu.CompilerParams(
            dimension_semantics=("parallel", "arbitrary")),
    )(past_p, future_p, early_p, later_p, ea_p, sfa_p, w1_p, b1_p, w2_p, b2_p)

    return out[:num_nodes, :O]


def _reference(edge_index, edge_attr, num_nodes, sf_edge_index, sf_edge_attr,
               params, node_agg_mode):
    """Pure-JAX (f32) reference mirroring the PyTorch forward."""
    past, future = edge_index[0], edge_index[1]
    early, later = sf_edge_index[0], sf_edge_index[1]

    def agg(src, idx):
        s = jax.ops.segment_sum(src, idx, num_segments=num_nodes)
        if node_agg_mode == "mean":
            c = jax.ops.segment_sum(jnp.ones((src.shape[0],), jnp.float32), idx,
                                    num_segments=num_nodes)
            s = s / jnp.maximum(c, 1.0)[:, None]
        return s

    flow_fwd = agg(edge_attr, future)
    flow_bwd = agg(edge_attr, past)
    flow_frm = agg(jnp.vstack((sf_edge_attr, sf_edge_attr)),
                   jnp.concatenate((early, later)))
    flow = jnp.concatenate([flow_fwd, flow_frm, flow_bwd], axis=1)
    w1, b1, w2, b2 = params
    h = jnp.maximum(flow @ w1 + b1, 0.0)
    return h @ w2 + b2


if __name__ == "__main__":
    # Small synthetic graph.
    N = 10          # num_nodes
    E = 24          # temporal edges
    F = 32          # temporal edge feature dim
    E_sf = 16       # same-frame edges
    F_sf = 32       # same-frame edge feature dim
    H = 64          # node_mlp hidden dim
    O = 32          # node_mlp output dim

    key = jax.random.PRNGKey(0)
    (k_p, k_f, k_e, k_sp, k_sf, k_se,
     k_w1, k_b1, k_w2, k_b2) = jax.random.split(key, 10)

    past_nodes = jax.random.randint(k_p, (E,), 0, N, dtype=jnp.int32)
    future_nodes = jax.random.randint(k_f, (E,), 0, N, dtype=jnp.int32)
    edge_index = jnp.stack([past_nodes, future_nodes], axis=0)            # [2, E]
    edge_attr = jax.random.normal(k_e, (E, F), dtype=jnp.float32)         # [E, F]

    early_nodes = jax.random.randint(k_sp, (E_sf,), 0, N, dtype=jnp.int32)
    later_nodes = jax.random.randint(k_sf, (E_sf,), 0, N, dtype=jnp.int32)
    same_frame_edge_index = jnp.stack([early_nodes, later_nodes], axis=0)  # [2, E_sf]
    same_frame_edge_attr = jax.random.normal(k_se, (E_sf, F_sf), jnp.float32)

    # node_mlp: Linear(2F + F_sf, H) -> ReLU -> Linear(H, O)
    Fin = 2 * F + F_sf
    w1 = jax.random.normal(k_w1, (Fin, H), jnp.float32) * (2.0 / Fin) ** 0.5
    b1 = jax.random.normal(k_b1, (H,), jnp.float32) * 0.01
    w2 = jax.random.normal(k_w2, (H, O), jnp.float32) * (2.0 / H) ** 0.5
    b2 = jax.random.normal(k_b2, (O,), jnp.float32) * 0.01
    params = (w1, b1, w2, b2)

    ok = True
    for mode in ("sum", "mean"):
        out = initial_contextual_node_model(
            edge_index, edge_attr, N, same_frame_edge_index,
            same_frame_edge_attr, params, node_agg_mode=mode)
        out = jax.block_until_ready(out)
        ref = _reference(edge_index, edge_attr, N, same_frame_edge_index,
                         same_frame_edge_attr, params, mode)
        # bf16 MXU inputs (f32 accumulation) -> compare relative to output scale.
        err = float(jnp.max(jnp.abs(out - ref)))
        scale = float(jnp.max(jnp.abs(ref))) + 1e-6
        ok &= (err / scale) < 2e-2

    if ok:
        print("KERNEL_OK")
    else:
        print("MISMATCH")
</pallas_src>

<mosaic_0001>
module attributes {stable_mosaic.version = 11 : i64} {
  func.func @_initial_contextual_node_kernel(%arg0: i32, %arg1: i32, %arg2: memref<1x256xi32, #tpu.memory_space<vmem>>, %arg3: memref<1x256xi32, #tpu.memory_space<vmem>>, %arg4: memref<1x256xi32, #tpu.memory_space<vmem>>, %arg5: memref<1x256xi32, #tpu.memory_space<vmem>>, %arg6: memref<256x128xbf16, #tpu.memory_space<vmem>>, %arg7: memref<256x128xbf16, #tpu.memory_space<vmem>>, %arg8: memref<384x128xf32, #tpu.memory_space<vmem>>, %arg9: memref<1x128xf32, #tpu.memory_space<vmem>>, %arg10: memref<128x128xf32, #tpu.memory_space<vmem>>, %arg11: memref<1x128xf32, #tpu.memory_space<vmem>>, %arg12: memref<128x128xf32, #tpu.memory_space<vmem>>, %arg13: memref<128x128xf32, #tpu.memory_space<vmem>>, %arg14: memref<128x128xf32, #tpu.memory_space<vmem>>, %arg15: memref<128x128xf32, #tpu.memory_space<vmem>>) attributes {dimension_semantics = [#tpu.dimension_semantics<parallel>, #tpu.dimension_semantics<arbitrary>], iteration_bounds = array<i64: 1, 1>, scalar_prefetch = 0 : i64, scratch_operands = 3 : i64, tpu.core_type = #tpu.core_type<tc>, window_params = [{transform_indices = @transform_0, window_bounds = array<i64: 1, 256>}, {transform_indices = @transform_1, window_bounds = array<i64: 1, 256>}, {transform_indices = @transform_2, window_bounds = array<i64: 1, 256>}, {transform_indices = @transform_3, window_bounds = array<i64: 1, 256>}, {transform_indices = @transform_4, window_bounds = array<i64: 256, 128>}, {transform_indices = @transform_5, window_bounds = array<i64: 256, 128>}, {pipeline_mode = #tpu.pipeline_mode<synchronous>, transform_indices = @transform_6, window_bounds = array<i64: 384, 128>}, {pipeline_mode = #tpu.pipeline_mode<synchronous>, transform_indices = @transform_7, window_bounds = array<i64: 1, 128>}, {pipeline_mode = #tpu.pipeline_mode<synchronous>, transform_indices = @transform_8, window_bounds = array<i64: 128, 128>}, {pipeline_mode = #tpu.pipeline_mode<synchronous>, transform_indices = @transform_9, window_bounds = array<i64: 1, 128>}, {transform_indices = @transform_10, window_bounds = array<i64: 128, 128>}]} {
    %c0_i32 = arith.constant 0 : i32
    %0 = arith.cmpi eq, %arg1, %c0_i32 : i32
    %1 = arith.extui %0 : i1 to i32
    %c0_i32_0 = arith.constant 0 : i32
    %2 = arith.cmpi ne, %1, %c0_i32_0 : i32
    scf.if %2 {
      %cst_28 = arith.constant 0.000000e+00 : f32
      %49 = vector.broadcast %cst_28 : f32 to vector<128x128xf32>
      %c0_29 = arith.constant 0 : index
      %c0_30 = arith.constant 0 : index
      %50 = vector.load %arg13[%c0_29, %c0_30] : memref<128x128xf32, #tpu.memory_space<vmem>>, vector<128x128xf32>
      tpu.vector_store %arg13[%c0_29, %c0_30], %49 {strides = array<i32>} : memref<128x128xf32, #tpu.memory_space<vmem>>, vector<128x128xf32>,
      %cst_31 = arith.constant 0.000000e+00 : f32
      %51 = vector.broadcast %cst_31 : f32 to vector<128x128xf32>
      %c0_32 = arith.constant 0 : index
      %c0_33 = arith.constant 0 : index
      %52 = vector.load %arg14[%c0_32, %c0_33] : memref<128x128xf32, #tpu.memory_space<vmem>>, vector<128x128xf32>
      tpu.vector_store %arg14[%c0_32, %c0_33], %51 {strides = array<i32>} : memref<128x128xf32, #tpu.memory_space<vmem>>, vector<128x128xf32>,
      %cst_34 = arith.constant 0.000000e+00 : f32
      %53 = vector.broadcast %cst_34 : f32 to vector<128x128xf32>
      %c0_35 = arith.constant 0 : index
      %c0_36 = arith.constant 0 : index
      %54 = vector.load %arg15[%c0_35, %c0_36] : memref<128x128xf32, #tpu.memory_space<vmem>>, vector<128x128xf32>
      tpu.vector_store %arg15[%c0_35, %c0_36], %53 {strides = array<i32>} : memref<128x128xf32, #tpu.memory_space<vmem>>, vector<128x128xf32>,
    } else {
    }
    %3 = tpu.iota {dimensions = array<i32: 0>} : vector<128x256xi32>
    %c128_i32 = arith.constant 128 : i32
    %4 = arith.muli %arg0, %c128_i32 : i32
    %5 = vector.broadcast %4 : i32 to vector<128x256xi32>
    %6 = arith.addi %3, %5 : vector<128x256xi32>
    %c0 = arith.constant 0 : index
    %c0_1 = arith.constant 0 : index
    %7 = vector.load %arg3[%c0, %c0_1] : memref<1x256xi32, #tpu.memory_space<vmem>>, vector<1x256xi32>
    %8 = vector.broadcast %7 : vector<1x256xi32> to vector<128x256xi32>
    %9 = arith.cmpi eq, %8, %6 : vector<128x256xi32>
    %10 = arith.extui %9 : vector<128x256xi1> to vector<128x256xi32>
    %11 = arith.sitofp %10 : vector<128x256xi32> to vector<128x256xf32>
    %12 = arith.truncf %11 : vector<128x256xf32> to vector<128x256xbf16>
    %c0_2 = arith.constant 0 : index
    %c0_3 = arith.constant 0 : index
    %13 = vector.load %arg2[%c0_2, %c0_3] : memref<1x256xi32, #tpu.memory_space<vmem>>, vector<1x256xi32>
    %14 = vector.broadcast %13 : vector<1x256xi32> to vector<128x256xi32>
    %15 = arith.cmpi eq, %14, %6 : vector<128x256xi32>
    %16 = arith.extui %15 : vector<128x256xi1> to vector<128x256xi32>
    %17 = arith.sitofp %16 : vector<128x256xi32> to vector<128x256xf32>
    %18 = arith.truncf %17 : vector<128x256xf32> to vector<128x256xbf16>
    %c0_4 = arith.constant 0 : index
    %c0_5 = arith.constant 0 : index
    %19 = vector.load %arg4[%c0_4, %c0_5] : memref<1x256xi32, #tpu.memory_space<vmem>>, vector<1x256xi32>
    %20 = vector.broadcast %19 : vector<1x256xi32> to vector<128x256xi32>
    %21 = arith.cmpi eq, %20, %6 : vector<128x256xi32>
    %22 = arith.extui %21 : vector<128x256xi1> to vector<128x256xi32>
    %23 = arith.sitofp %22 : vector<128x256xi32> to vector<128x256xf32>
    %24 = arith.truncf %23 : vector<128x256xf32> to vector<128x256xbf16>
    %c0_6 = arith.constant 0 : index
    %c0_7 = arith.constant 0 : index
    %25 = vector.load %arg5[%c0_6, %c0_7] : memref<1x256xi32, #tpu.memory_space<vmem>>, vector<1x256xi32>
    %26 = vector.broadcast %25 : vector<1x256xi32> to vector<128x256xi32>
    %27 = arith.cmpi eq, %26, %6 : vector<128x256xi32>
    %28 = arith.extui %27 : vector<128x256xi1> to vector<128x256xi32>
    %29 = arith.sitofp %28 : vector<128x256xi32> to vector<128x256xf32>
    %30 = arith.truncf %29 : vector<128x256xf32> to vector<128x256xbf16>
    %31 = arith.addf %24, %30 : vector<128x256xbf16>
    %c0_8 = arith.constant 0 : index
    %c0_9 = arith.constant 0 : index
    %32 = vector.load %arg6[%c0_8, %c0_9] : memref<256x128xbf16, #tpu.memory_space<vmem>>, vector<256x128xbf16>
    %c0_10 = arith.constant 0 : index
    %c0_11 = arith.constant 0 : index
    %33 = vector.load %arg7[%c0_10, %c0_11] : memref<256x128xbf16, #tpu.memory_space<vmem>>, vector<256x128xbf16>
    %c0_12 = arith.constant 0 : index
    %c0_13 = arith.constant 0 : index
    %34 = vector.load %arg13[%c0_12, %c0_13] : memref<128x128xf32, #tpu.memory_space<vmem>>, vector<128x128xf32>
    %cst = arith.constant dense<0.000000e+00> : vector<128x128xf32>
    %35 = tpu.matmul %12, %32, %cst {dimension_numbers = #tpu.dot_dimension_numbers<[1], [0], [0], [1], [0, 0, 1, 1], [], []>} : vector<128x256xbf16>, vector<256x128xbf16>, vector<128x128xf32> -> vector<128x128xf32>
    %36 = arith.addf %34, %35 : vector<128x128xf32>
    %c0_14 = arith.constant 0 : index
    %c0_15 = arith.constant 0 : index
    %37 = vector.load %arg13[%c0_14, %c0_15] : memref<128x128xf32, #tpu.memory_space<vmem>>, vector<128x128xf32>
    tpu.vector_store %arg13[%c0_14, %c0_15], %36 {strides = array<i32>} : memref<128x128xf32, #tpu.memory_space<vmem>>, vector<128x128xf32>,
    %c0_16 = arith.constant 0 : index
    %c0_17 = arith.constant 0 : index
    %38 = vector.load %arg15[%c0_16, %c0_17] : memref<128x128xf32, #tpu.memory_space<vmem>>, vector<128x128xf32>
    %cst_18 = arith.constant dense<0.000000e+00> : vector<128x128xf32>
    %39 = tpu.matmul %18, %32, %cst_18 {dimension_numbers = #tpu.dot_dimension_numbers<[1], [0], [0], [1], [0, 0, 1, 1], [], []>} : vector<128x256xbf16>, vector<256x128xbf16>, vector<128x128xf32> -> vector<128x128xf32>
    %40 = arith.addf %38, %39 : vector<128x128xf32>
    %c0_19 = arith.constant 0 : index
    %c0_20 = arith.constant 0 : index
    %41 = vector.load %arg15[%c0_19, %c0_20] : memref<128x128xf32, #tpu.memory_space<vmem>>, vector<128x128xf32>
    tpu.vector_store %arg15[%c0_19, %c0_20], %40 {strides = array<i32>} : memref<128x128xf32, #tpu.memory_space<vmem>>, vector<128x128xf32>,
    %c0_21 = arith.constant 0 : index
    %c0_22 = arith.constant 0 : index
    %42 = vector.load %arg14[%c0_21, %c0_22] : memref<128x128xf32, #tpu.memory_space<vmem>>, vector<128x128xf32>
    %cst_23 = arith.constant dense<0.000000e+00> : vector<128x128xf32>
    %43 = tpu.matmul %31, %33, %cst_23 {dimension_numbers = #tpu.dot_dimension_numbers<[1], [0], [0], [1], [0, 0, 1, 1], [], []>} : vector<128x256xbf16>, vector<256x128xbf16>, vector<128x128xf32> -> vector<128x128xf32>
    %44 = arith.addf %42, %43 : vector<128x128xf32>
    %c0_24 = arith.constant 0 : index
    %c0_25 = arith.constant 0 : index
    %45 = vector.load %arg14[%c0_24, %c0_25] : memref<128x128xf32, #tpu.memory_space<vmem>>, vector<128x128xf32>
    tpu.vector_store %arg14[%c0_24, %c0_25], %44 {strides = array<i32>} : memref<128x128xf32, #tpu.memory_space<vmem>>, vector<128x128xf32>,
    %c0_i32_26 = arith.constant 0 : i32
    %46 = arith.cmpi eq, %arg1, %c0_i32_26 : i32
    %47 = arith.extui %46 : i1 to i32
    %c0_i32_27 = arith.constant 0 : i32
    %48 = arith.cmpi ne, %47, %c0_i32_27 : i32
    scf.if %48 {
      %c0_28 = arith.constant 0 : index
      %c0_29 = arith.constant 0 : index
      %49 = vector.load %arg13[%c0_28, %c0_29] : memref<128x128xf32, #tpu.memory_space<vmem>>, vector<128x128xf32>
      %c0_30 = arith.constant 0 : index
      %c0_31 = arith.constant 0 : index
      %50 = vector.load %arg14[%c0_30, %c0_31] : memref<128x128xf32, #tpu.memory_space<vmem>>, vector<128x128xf32>
      %c0_32 = arith.constant 0 : index
      %c0_33 = arith.constant 0 : index
      %51 = vector.load %arg15[%c0_32, %c0_33] : memref<128x128xf32, #tpu.memory_space<vmem>>, vector<128x128xf32>
      %52 = tpu.concatenate %49, %50, %51 in 1 : vector<128x128xf32>, vector<128x128xf32>, vector<128x128xf32> -> vector<128x384xf32>
      %c0_34 = arith.constant 0 : index
      %c0_35 = arith.constant 0 : index
      %53 = vector.load %arg8[%c0_34, %c0_35] : memref<384x128xf32, #tpu.memory_space<vmem>>, vector<384x128xf32>
      %cst_36 = arith.constant dense<0.000000e+00> : vector<128x128xf32>
      %54 = tpu.matmul %52, %53, %cst_36 {dimension_numbers = #tpu.dot_dimension_numbers<[1], [0], [0], [1], [0, 0, 1, 1], [], []>} : vector<128x384xf32>, vector<384x128xf32>, vector<128x128xf32> -> vector<128x128xf32>
      %c0_37 = arith.constant 0 : index
      %c0_38 = arith.constant 0 : index
      %55 = vector.load %arg9[%c0_37, %c0_38] : memref<1x128xf32, #tpu.memory_space<vmem>>, vector<1x128xf32>
      %56 = vector.broadcast %55 : vector<1x128xf32> to vector<128x128xf32>
      %57 = arith.addf %54, %56 : vector<128x128xf32>
      %cst_39 = arith.constant 0.000000e+00 : f32
      %58 = vector.broadcast %cst_39 : f32 to vector<128x128xf32>
      %59 = arith.maximumf %57, %58 : vector<128x128xf32>
      %c0_40 = arith.constant 0 : index
      %c0_41 = arith.constant 0 : index
      %60 = vector.load %arg10[%c0_40, %c0_41] : memref<128x128xf32, #tpu.memory_space<vmem>>, vector<128x128xf32>
      %cst_42 = arith.constant dense<0.000000e+00> : vector<128x128xf32>
      %61 = tpu.matmul %59, %60, %cst_42 {dimension_numbers = #tpu.dot_dimension_numbers<[1], [0], [0], [1], [0, 0, 1, 1], [], []>} : vector<128x128xf32>, vector<128x128xf32>, vector<128x128xf32> -> vector<128x128xf32>
      %c0_43 = arith.constant 0 : index
      %c0_44 = arith.constant 0 : index
      %62 = vector.load %arg11[%c0_43, %c0_44] : memref<1x128xf32, #tpu.memory_space<vmem>>, vector<1x128xf32>
      %63 = vector.broadcast %62 : vector<1x128xf32> to vector<128x128xf32>
      %64 = arith.addf %61, %63 : vector<128x128xf32>
      %c0_45 = arith.constant 0 : index
      %c0_46 = arith.constant 0 : index
      %65 = vector.load %arg12[%c0_45, %c0_46] : memref<128x128xf32, #tpu.memory_space<vmem>>, vector<128x128xf32>
      tpu.vector_store %arg12[%c0_45, %c0_46], %64 {strides = array<i32>} : memref<128x128xf32, #tpu.memory_space<vmem>>, vector<128x128xf32>,
    } else {
    }
    return
  }
  func.func @transform_0(%arg0: i32, %arg1: i32) -> (i32, i32) {
    %c0_i32 = arith.constant 0 : i32
    %c0_i32_0 = arith.constant 0 : i32
    return %c0_i32, %arg1 : i32, i32
  }
  func.func @transform_1(%arg0: i32, %arg1: i32) -> (i32, i32) {
    %c0_i32 = arith.constant 0 : i32
    %c0_i32_0 = arith.constant 0 : i32
    return %c0_i32, %arg1 : i32, i32
  }
  func.func @transform_2(%arg0: i32, %arg1: i32) -> (i32, i32) {
    %c0_i32 = arith.constant 0 : i32
    %c0_i32_0 = arith.constant 0 : i32
    return %c0_i32, %arg1 : i32, i32
  }
  func.func @transform_3(%arg0: i32, %arg1: i32) -> (i32, i32) {
    %c0_i32 = arith.constant 0 : i32
    %c0_i32_0 = arith.constant 0 : i32
    return %c0_i32, %arg1 : i32, i32
  }
  func.func @transform_4(%arg0: i32, %arg1: i32) -> (i32, i32) {
    %c0_i32 = arith.constant 0 : i32
    %c0_i32_0 = arith.constant 0 : i32
    return %arg1, %c0_i32 : i32, i32
  }
  func.func @transform_5(%arg0: i32, %arg1: i32) -> (i32, i32) {
    %c0_i32 = arith.constant 0 : i32
    %c0_i32_0 = arith.constant 0 : i32
    return %arg1, %c0_i32 : i32, i32
  }
  func.func @transform_6(%arg0: i32, %arg1: i32) -> (i32, i32) {
    %c0_i32 = arith.constant 0 : i32
    %c0_i32_0 = arith.constant 0 : i32
    %c0_i32_1 = arith.constant 0 : i32
    return %c0_i32, %c0_i32_0 : i32, i32
  }
  func.func @transform_7(%arg0: i32, %arg1: i32) -> (i32, i32) {
    %c0_i32 = arith.constant 0 : i32
    %c0_i32_0 = arith.constant 0 : i32
    %c0_i32_1 = arith.constant 0 : i32
    return %c0_i32, %c0_i32_0 : i32, i32
  }
  func.func @transform_8(%arg0: i32, %arg1: i32) -> (i32, i32) {
    %c0_i32 = arith.constant 0 : i32
    %c0_i32_0 = arith.constant 0 : i32
    %c0_i32_1 = arith.constant 0 : i32
    return %c0_i32, %c0_i32_0 : i32, i32
  }
  func.func @transform_9(%arg0: i32, %arg1: i32) -> (i32, i32) {
    %c0_i32 = arith.constant 0 : i32
    %c0_i32_0 = arith.constant 0 : i32
    %c0_i32_1 = arith.constant 0 : i32
    return %c0_i32, %c0_i32_0 : i32, i32
  }
  func.func @transform_10(%arg0: i32, %arg1: i32) -> (i32, i32) {
    %c0_i32 = arith.constant 0 : i32
    %c0_i32_0 = arith.constant 0 : i32
    return %arg0, %c0_i32 : i32, i32
  }
}

</mosaic_0001>

<llo_original>
// kernel: tpu_custom_call.1
$region0: #{tpu_custom_call.1}
  #allocation0 [shape = 'u32[]', space=smem, size = 0x4, offset = 0x4, fixed_abs, tag = 'smem constant byte address 0x4 - core index']
  #allocation1 [shape = 'u32[72,128]{1,0:T(1,128)}', space=vmem, size = 0x9000, scoped, tag = 'internal scratch']
  #allocation2 [shape = 'f32[128,128]{1,0:T(8,128)}', space=vmem, size = 0x10000, scoped, tag = 'scratch operand']
  #allocation3 [shape = 'f32[128,128]{1,0:T(8,128)}', space=vmem, size = 0x10000, scoped, tag = 'scratch operand']
  #allocation4 [shape = 'f32[128,128]{1,0:T(8,128)}', space=vmem, size = 0x10000, scoped, tag = 'scratch operand']
  %s0 = inlined_call_operand.hbm [shape: s32[1,256], index: 0, kind: input, shape index: {}]
  %s1 = inlined_call_operand.hbm [shape: s32[1,256], index: 1, kind: input, shape index: {}]
  %s2 = inlined_call_operand.hbm [shape: s32[1,256], index: 2, kind: input, shape index: {}]
  %s3 = inlined_call_operand.vmem [shape: s32[1,256], index: 3, kind: input, shape index: {}]
  %s4 = inlined_call_operand.hbm [shape: bf16[256,128], index: 4, kind: input, shape index: {}]
  %s5 = inlined_call_operand.hbm [shape: bf16[256,128], index: 5, kind: input, shape index: {}]
  %s6 = inlined_call_operand.hbm [shape: f32[384,128], index: 6, kind: input, shape index: {}]
  %s7 = inlined_call_operand.vmem [shape: f32[1,128], index: 7, kind: input, shape index: {}]
  %s8 = inlined_call_operand.hbm [shape: f32[128,128], index: 8, kind: input, shape index: {}]
  %s9 = inlined_call_operand.vmem [shape: f32[1,128], index: 9, kind: input, shape index: {}]
  %s10 = inlined_call_operand.hbm [shape: f32[128,128], index: 10, kind: output, shape index: {}]
  %s11 = sld [smem:[#allocation0]]
  $region86: #{tpu_custom_call.1} parent=0
    _
  %s13 = ssub.s32 1, %s11
  %s14 = scalar_select 0, %s13, %s11
  $region1: #{tpu_custom_call.1} parent=0
    #allocation5 [shape = 'u8[1024]{0}', space=vmem, size = 0x400, scoped, tag = 'input window, operand 0, single buffered']
    #allocation6 [shape = 's32[1]{0}', space=sflag, size = 0x4, scoped, tag = 'scoped memory for tpu_custom_call.1']
    #allocation7 [shape = 's32[1]{0}', space=sflag, size = 0x4, scoped, tag = 'scoped memory for tpu_custom_call.1']
    #allocation8 [shape = 'u8[1024]{0}', space=vmem, size = 0x400, scoped, tag = 'input window, operand 1, single buffered']
    #allocation9 [shape = 's32[1]{0}', space=sflag, size = 0x4, scoped, tag = 'scoped memory for tpu_custom_call.1']
    #allocation10 [shape = 'u8[1024]{0}', space=vmem, size = 0x400, scoped, tag = 'input window, operand 2, single buffered']
    #allocation11 [shape = 'u8[65536]{0}', space=vmem, size = 0x10000, scoped, tag = 'input window, operand 4, single buffered']
    #allocation12 [shape = 's32[1]{0}', space=sflag, size = 0x4, scoped, tag = 'scoped memory for tpu_custom_call.1']
    #allocation13 [shape = 'u8[65536]{0}', space=vmem, size = 0x10000, scoped, tag = 'input window, operand 5, single buffered']
    #allocation14 [shape = 'u8[196608]{0}', space=vmem, size = 0x30000, scoped, tag = 'input window, operand 6, single buffered']
    #allocation15 [shape = 's32[1]{0}', space=sflag, size = 0x4, scoped, tag = 'scoped memory for tpu_custom_call.1']
    #allocation16 [shape = 'u8[65536]{0}', space=vmem, size = 0x10000, scoped, tag = 'input window, operand 8, single buffered']
    #allocation17 [shape = 'u8[65536]{0}', space=vmem, size = 0x10000, scoped, tag = 'output window, operand 0, single buffered']
    %15 = vsyncpa [#allocation6], 0
    %16 = vsyncpa [#allocation9], 0
    %17 = vsyncpa [#allocation12], 0
    %18 = vsyncpa [#allocation15], 0
    %19 = vsyncpa [#allocation7], 0
    // Predicated region
    $region2: #{tpu_custom_call.1} parent=1 // pred_check
      _
    $region3: #{tpu_custom_call.1} parent=1 // pred_check_branch
      %21 = sbr.rel (0) target = $region5
    $region4: #{tpu_custom_call.1} parent=1 // pred_region
      %23 = vsyncadd [#allocation6], 0
      %s25 = sshll.u32 %s0, 4
      %s26 = int_to_ptr.hbm [resolvable:$true] %s25
      %s27 = sshll.u32 [#allocation5], 4
      %s28 = int_to_ptr.vmem [resolvable:$true] %s27
      %30 = dma.hbm_to_vmem [thread:$0]  %s26, 32, %s28, [#allocation6]
    $region5: #{tpu_custom_call.1} parent=1 // pred_fallthru
      _
    // Predicated region
    $region6: #{tpu_custom_call.1} parent=1 // pred_check
      _
    $region7: #{tpu_custom_call.1} parent=1 // pred_check_branch
      %32 = sbr.rel (0) target = $region9
    $region8: #{tpu_custom_call.1} parent=1 // pred_region
      %34 = vsyncadd [#allocation9], 0
      %s36 = sshll.u32 %s1, 4
      %s37 = int_to_ptr.hbm [resolvable:$true] %s36
      %s38 = sshll.u32 [#allocation8], 4
      %s39 = int_to_ptr.vmem [resolvable:$true] %s38
      %41 = dma.hbm_to_vmem [thread:$0]  %s37, 32, %s39, [#allocation9]
    $region9: #{tpu_custom_call.1} parent=1 // pred_fallthru
      _
    // Predicated region
    $region10: #{tpu_custom_call.1} parent=1 // pred_check
      _
    $region11: #{tpu_custom_call.1} parent=1 // pred_check_branch
      %43 = sbr.rel (0) target = $region13
    $region12: #{tpu_custom_call.1} parent=1 // pred_region
      %45 = vsyncadd [#allocation9], 0
      %s47 = sshll.u32 %s2, 4
      %s48 = int_to_ptr.hbm [resolvable:$true] %s47
      %s49 = sshll.u32 [#allocation10], 4
      %s50 = int_to_ptr.vmem [resolvable:$true] %s49
      %52 = dma.hbm_to_vmem [thread:$0]  %s48, 32, %s50, [#allocation9]
    $region13: #{tpu_custom_call.1} parent=1 // pred_fallthru
      _
    // Predicated region
    $region14: #{tpu_custom_call.1} parent=1 // pred_check
      _
    $region15: #{tpu_custom_call.1} parent=1 // pred_check_branch
      %54 = sbr.rel (0) target = $region17
    $region16: #{tpu_custom_call.1} parent=1 // pred_region
      _
    $region17: #{tpu_custom_call.1} parent=1 // pred_fallthru
      _
    // Predicated region
    $region18: #{tpu_custom_call.1} parent=1 // pred_check
      _
    $region19: #{tpu_custom_call.1} parent=1 // pred_check_branch
      %56 = sbr.rel (0) target = $region21
    $region20: #{tpu_custom_call.1} parent=1 // pred_region
      %58 = vsyncadd [#allocation12], 0
      %s59 = sshll.u32 %s4, 4
      %s60 = int_to_ptr.hbm [resolvable:$true] %s59
      %s61 = sshll.u32 [#allocation11], 4
      %s62 = int_to_ptr.vmem [resolvable:$true] %s61
      %67 = dma.hbm_to_vmem [thread:$0]  %s60, 2048, %s62, [#allocation12], 64, 64, 4
    $region21: #{tpu_custom_call.1} parent=1 // pred_fallthru
      _
    // Predicated region
    $region22: #{tpu_custom_call.1} parent=1 // pred_check
      _
    $region23: #{tpu_custom_call.1} parent=1 // pred_check_branch
      %69 = sbr.rel (0) target = $region25
    $region24: #{tpu_custom_call.1} parent=1 // pred_region
      %71 = vsyncadd [#allocation12], 0
      %s72 = sshll.u32 %s5, 4
      %s73 = int_to_ptr.hbm [resolvable:$true] %s72
      %s74 = sshll.u32 [#allocation13], 4
      %s75 = int_to_ptr.vmem [resolvable:$true] %s74
      %80 = dma.hbm_to_vmem [thread:$0]  %s73, 2048, %s75, [#allocation12], 64, 64, 4
    $region25: #{tpu_custom_call.1} parent=1 // pred_fallthru
      _
    // Predicated region
    $region26: #{tpu_custom_call.1} parent=1 // pred_check
      _
    $region27: #{tpu_custom_call.1} parent=1 // pred_check_branch
      %82 = sbr.rel (0) target = $region29
    $region28: #{tpu_custom_call.1} parent=1 // pred_region
      %84 = vsyncadd [#allocation15], 0
      %s85 = sshll.u32 %s6, 4
      %s86 = int_to_ptr.hbm [resolvable:$true] %s85
      %s87 = sshll.u32 [#allocation14], 4
      %s88 = int_to_ptr.vmem [resolvable:$true] %s87
      %93 = dma.hbm_to_vmem [thread:$0]  %s86, 6144, %s88, [#allocation15], 128, 128, 8
    $region29: #{tpu_custom_call.1} parent=1 // pred_fallthru
      _
    // Predicated region
    $region30: #{tpu_custom_call.1} parent=1 // pred_check
      _
    $region31: #{tpu_custom_call.1} parent=1 // pred_check_branch
      %95 = sbr.rel (0) target = $region33
    $region32: #{tpu_custom_call.1} parent=1 // pred_region
      _
    $region33: #{tpu_custom_call.1} parent=1 // pred_fallthru
      _
    // Predicated region
    $region34: #{tpu_custom_call.1} parent=1 // pred_check
      _
    $region35: #{tpu_custom_call.1} parent=1 // pred_check_branch
      %97 = sbr.rel (0) target = $region37
    $region36: #{tpu_custom_call.1} parent=1 // pred_region
      %99 = vsyncadd [#allocation15], 0
      %s100 = sshll.u32 %s8, 4
      %s101 = int_to_ptr.hbm [resolvable:$true] %s100
      %s102 = sshll.u32 [#allocation16], 4
      %s103 = int_to_ptr.vmem [resolvable:$true] %s102
      %108 = dma.hbm_to_vmem [thread:$0]  %s101, 2048, %s103, [#allocation15], 128, 128, 8
    $region37: #{tpu_custom_call.1} parent=1 // pred_fallthru
      _
    // Predicated region
    $region38: #{tpu_custom_call.1} parent=1 // pred_check
      _
    $region39: #{tpu_custom_call.1} parent=1 // pred_check_branch
      %110 = sbr.rel (0) target = $region41
    $region40: #{tpu_custom_call.1} parent=1 // pred_region
      _
    $region41: #{tpu_custom_call.1} parent=1 // pred_fallthru
      _
    // Predicated region
    $region42: #{tpu_custom_call.1} parent=1 // pred_check
      _
    $region43: #{tpu_custom_call.1} parent=1 // pred_check_branch
      %112 = sbr.rel (0) target = $region45
    $region44: #{tpu_custom_call.1} parent=1 // pred_region
      %114 = dma.done [#allocation6], 32
    $region45: #{tpu_custom_call.1} parent=1 // pred_fallthru
      _
    // Predicated region
    $region46: #{tpu_custom_call.1} parent=1 // pred_check
      _
    $region47: #{tpu_custom_call.1} parent=1 // pred_check_branch
      %116 = sbr.rel (0) target = $region49
    $region48: #{tpu_custom_call.1} parent=1 // pred_region
      %118 = dma.done [#allocation9], 32
    $region49: #{tpu_custom_call.1} parent=1 // pred_fallthru
      _
    // Predicated region
    $region50: #{tpu_custom_call.1} parent=1 // pred_check
      _
    $region51: #{tpu_custom_call.1} parent=1 // pred_check_branch
      %120 = sbr.rel (0) target = $region53
    $region52: #{tpu_custom_call.1} parent=1 // pred_region
      %122 = dma.done [#allocation9], 32
    $region53: #{tpu_custom_call.1} parent=1 // pred_fallthru
      _
    // Predicated region
    $region54: #{tpu_custom_call.1} parent=1 // pred_check
      _
    $region55: #{tpu_custom_call.1} parent=1 // pred_check_branch
      %124 = sbr.rel (0) target = $region57
    $region56: #{tpu_custom_call.1} parent=1 // pred_region
      %126 = dma.done [#allocation12], 2048
    $region57: #{tpu_custom_call.1} parent=1 // pred_fallthru
      _
    // Predicated region
    $region58: #{tpu_custom_call.1} parent=1 // pred_check
      _
    $region59: #{tpu_custom_call.1} parent=1 // pred_check_branch
      %128 = sbr.rel (0) target = $region61
    $region60: #{tpu_custom_call.1} parent=1 // pred_region
      %130 = dma.done [#allocation12], 2048
    $region61: #{tpu_custom_call.1} parent=1 // pred_fallthru
      _
    // Predicated region
    $region62: #{tpu_custom_call.1} parent=1 // pred_check
      _
    $region63: #{tpu_custom_call.1} parent=1 // pred_check_branch
      %132 = sbr.rel (0) target = $region65
    $region64: #{tpu_custom_call.1} parent=1 // pred_region
      %134 = dma.done [#allocation15], 6144
    $region65: #{tpu_custom_call.1} parent=1 // pred_fallthru
      _
    // Predicated region
    $region66: #{tpu_custom_call.1} parent=1 // pred_check
      _
    $region67: #{tpu_custom_call.1} parent=1 // pred_check_branch
      %136 = sbr.rel (0) target = $region69
    $region68: #{tpu_custom_call.1} parent=1 // pred_region
      %138 = dma.done [#allocation15], 2048
    $region69: #{tpu_custom_call.1} parent=1 // pred_fallthru
      _
    %p139 = scmp.eq.s32.totalorder 0, 0
    // Predicated region
    $region70: #{tpu_custom_call.1} parent=1 // pred_check
      %p140 = pneg %p139
    $region71: #{tpu_custom_call.1} parent=1 // pred_check_branch
      %142 = sbr.rel (%p140) target = $region73
    $region72: #{tpu_custom_call.1} parent=1 // pred_region
      %143 = vst [vmem:[#allocation2] sm:$0xff] 0.0
      %144 = vst [vmem:[#allocation2 + $0x8] sm:$0xff] 0.0
      %145 = vst [vmem:[#allocation2 + $0x10] sm:$0xff] 0.0
      %146 = vst [vmem:[#allocation2 + $0x18] sm:$0xff] 0.0
      %147 = vst [vmem:[#allocation2 + $0x20] sm:$0xff] 0.0
      %148 = vst [vmem:[#allocation2 + $0x28] sm:$0xff] 0.0
      %149 = vst [vmem:[#allocation2 + $0x30] sm:$0xff] 0.0
      %150 = vst [vmem:[#allocation2 + $0x38] sm:$0xff] 0.0
      %151 = vst [vmem:[#allocation2 + $0x40] sm:$0xff] 0.0
      %152 = vst [vmem:[#allocation2 + $0x48] sm:$0xff] 0.0
      %153 = vst [vmem:[#allocation2 + $0x50] sm:$0xff] 0.0
      %154 = vst [vmem:[#allocation2 + $0x58] sm:$0xff] 0.0
      %155 = vst [vmem:[#allocation2 + $0x60] sm:$0xff] 0.0
      %156 = vst [vmem:[#allocation2 + $0x68] sm:$0xff] 0.0
      %157 = vst [vmem:[#allocation2 + $0x70] sm:$0xff] 0.0
      %158 = vst [vmem:[#allocation2 + $0x78] sm:$0xff] 0.0
      %159 = vst [vmem:[#allocation3] sm:$0xff] 0.0
      %160 = vst [vmem:[#allocation3 + $0x8] sm:$0xff] 0.0
      %161 = vst [vmem:[#allocation3 + $0x10] sm:$0xff] 0.0
      %162 = vst [vmem:[#allocation3 + $0x18] sm:$0xff] 0.0
      %163 = vst [vmem:[#allocation3 + $0x20] sm:$0xff] 0.0
      %164 = vst [vmem:[#allocation3 + $0x28] sm:$0xff] 0.0
      %165 = vst [vmem:[#allocation3 + $0x30] sm:$0xff] 0.0
      %166 = vst [vmem:[#allocation3 + $0x38] sm:$0xff] 0.0
      %167 = vst [vmem:[#allocation3 + $0x40] sm:$0xff] 0.0
      %168 = vst [vmem:[#allocation3 + $0x48] sm:$0xff] 0.0
      %169 = vst [vmem:[#allocation3 + $0x50] sm:$0xff] 0.0
      %170 = vst [vmem:[#allocation3 + $0x58] sm:$0xff] 0.0
      %171 = vst [vmem:[#allocation3 + $0x60] sm:$0xff] 0.0
      %172 = vst [vmem:[#allocation3 + $0x68] sm:$0xff] 0.0
      %173 = vst [vmem:[#allocation3 + $0x70] sm:$0xff] 0.0
      %174 = vst [vmem:[#allocation3 + $0x78] sm:$0xff] 0.0
      %175 = vst [vmem:[#allocation4] sm:$0xff] 0.0
      %176 = vst [vmem:[#allocation4 + $0x8] sm:$0xff] 0.0
      %177 = vst [vmem:[#allocation4 + $0x10] sm:$0xff] 0.0
      %178 = vst [vmem:[#allocation4 + $0x18] sm:$0xff] 0.0
      %179 = vst [vmem:[#allocation4 + $0x20] sm:$0xff] 0.0
      %180 = vst [vmem:[#allocation4 + $0x28] sm:$0xff] 0.0
      %181 = vst [vmem:[#allocation4 + $0x30] sm:$0xff] 0.0
      %182 = vst [vmem:[#allocation4 + $0x38] sm:$0xff] 0.0
      %183 = vst [vmem:[#allocation4 + $0x40] sm:$0xff] 0.0
      %184 = vst [vmem:[#allocation4 + $0x48] sm:$0xff] 0.0
      %185 = vst [vmem:[#allocation4 + $0x50] sm:$0xff] 0.0
      %186 = vst [vmem:[#allocation4 + $0x58] sm:$0xff] 0.0
      %187 = vst [vmem:[#allocation4 + $0x60] sm:$0xff] 0.0
      %188 = vst [vmem:[#allocation4 + $0x68] sm:$0xff] 0.0
      %189 = vst [vmem:[#allocation4 + $0x70] sm:$0xff] 0.0
      %190 = vst [vmem:[#allocation4 + $0x78] sm:$0xff] 0.0
    $region73: #{tpu_custom_call.1} parent=1 // pred_fallthru
      _
    %v191 = vlaneseq
    %v192 = vshrl.u32 %v191, 7
    %v193 = vadd.s32 %v192, 8
    %v194 = vadd.s32 %v192, 16
    %v195 = vadd.s32 %v192, 24
    %v196 = vadd.s32 %v192, 32
    %v197 = vadd.s32 %v192, 40
    %v198 = vadd.s32 %v192, 48
    %v199 = vadd.s32 %v192, 56
    %v200 = vadd.s32 %v192, 64
    %v201 = vadd.s32 %v192, 72
    %v202 = vadd.s32 %v192, 80
    %v203 = vadd.s32 %v192, 88
    %v204 = vadd.s32 %v192, 96
    %v205 = vadd.s32 %v192, 104
    %v206 = vadd.s32 %v192, 112
    %v207 = vadd.s32 %v192, 120
    %s208 = smul.u32 0, 128
    %v209 = vstv %s208
    %v210 = vadd.s32 %v192, %v209
    %v211 = vadd.s32 %v193, %v209
    %v212 = vadd.s32 %v194, %v209
    %v213 = vadd.s32 %v195, %v209
    %v214 = vadd.s32 %v196, %v209
    %v215 = vadd.s32 %v197, %v209
    %v216 = vadd.s32 %v198, %v209
    %v217 = vadd.s32 %v199, %v209
    %v218 = vadd.s32 %v200, %v209
    %v219 = vadd.s32 %v201, %v209
    %v220 = vadd.s32 %v202, %v209
    %v221 = vadd.s32 %v203, %v209
    %v222 = vadd.s32 %v204, %v209
    %v223 = vadd.s32 %v205, %v209
    %v224 = vadd.s32 %v206, %v209
    %v225 = vadd.s32 %v207, %v209
    %v226 = vld [vmem:[#allocation8] sm:$0x3]
    %v227 = vperm.slane %v226, 0
    %v228 = vperm.slane %v226, 1
    %vm229 = vcmp.eq.s32.totalorder %v227, %v210
    %vm230 = vcmp.eq.s32.totalorder %v228, %v210
    %vm231 = vcmp.eq.s32.totalorder %v227, %v211
    %vm232 = vcmp.eq.s32.totalorder %v228, %v211
    %vm233 = vcmp.eq.s32.totalorder %v227, %v212
    %vm234 = vcmp.eq.s32.totalorder %v228, %v212
    %vm235 = vcmp.eq.s32.totalorder %v227, %v213
    %vm236 = vcmp.eq.s32.totalorder %v228, %v213
    %vm237 = vcmp.eq.s32.totalorder %v227, %v214
    %vm238 = vcmp.eq.s32.totalorder %v228, %v214
    %vm239 = vcmp.eq.s32.totalorder %v227, %v215
    %vm240 = vcmp.eq.s32.totalorder %v228, %v215
    %vm241 = vcmp.eq.s32.totalorder %v227, %v216
    %vm242 = vcmp.eq.s32.totalorder %v228, %v216
    %vm243 = vcmp.eq.s32.totalorder %v227, %v217
    %vm244 = vcmp.eq.s32.totalorder %v228, %v217
    %vm245 = vcmp.eq.s32.totalorder %v227, %v218
    %vm246 = vcmp.eq.s32.totalorder %v228, %v218
    %vm247 = vcmp.eq.s32.totalorder %v227, %v219
    %vm248 = vcmp.eq.s32.totalorder %v228, %v219
    %vm249 = vcmp.eq.s32.totalorder %v227, %v220
    %vm250 = vcmp.eq.s32.totalorder %v228, %v220
    %vm251 = vcmp.eq.s32.totalorder %v227, %v221
    %vm252 = vcmp.eq.s32.totalorder %v228, %v221
    %vm253 = vcmp.eq.s32.totalorder %v227, %v222
    %vm254 = vcmp.eq.s32.totalorder %v228, %v222
    %vm255 = vcmp.eq.s32.totalorder %v227, %v223
    %vm256 = vcmp.eq.s32.totalorder %v228, %v223
    %vm257 = vcmp.eq.s32.totalorder %v227, %v224
    %vm258 = vcmp.eq.s32.totalorder %v228, %v224
    %vm259 = vcmp.eq.s32.totalorder %v227, %v225
    %vm260 = vcmp.eq.s32.totalorder %v228, %v225
    %v261 = vsel %vm229, 1, 0
    %v262 = vsel %vm230, 1, 0
    %v263 = vsel %vm231, 1, 0
    %v264 = vsel %vm232, 1, 0
    %v265 = vsel %vm233, 1, 0
    %v266 = vsel %vm234, 1, 0
    %v267 = vsel %vm235, 1, 0
    %v268 = vsel %vm236, 1, 0
    %v269 = vsel %vm237, 1, 0
    %v270 = vsel %vm238, 1, 0
    %v271 = vsel %vm239, 1, 0
    %v272 = vsel %vm240, 1, 0
    %v273 = vsel %vm241, 1, 0
    %v274 = vsel %vm242, 1, 0
    %v275 = vsel %vm243, 1, 0
    %v276 = vsel %vm244, 1, 0
    %v277 = vsel %vm245, 1, 0
    %v278 = vsel %vm246, 1, 0
    %v279 = vsel %vm247, 1, 0
    %v280 = vsel %vm248, 1, 0
    %v281 = vsel %vm249, 1, 0
    %v282 = vsel %vm250, 1, 0
    %v283 = vsel %vm251, 1, 0
    %v284 = vsel %vm252, 1, 0
    %v285 = vsel %vm253, 1, 0
    %v286 = vsel %vm254, 1, 0
    %v287 = vsel %vm255, 1, 0
    %v288 = vsel %vm256, 1, 0
    %v289 = vsel %vm257, 1, 0
    %v290 = vsel %vm258, 1, 0
    %v291 = vsel %vm259, 1, 0
    %v292 = vsel %vm260, 1, 0
    %v293 = vcvt.s32.f32 %v261
    %v294 = vcvt.s32.f32 %v262
    %v295 = vcvt.s32.f32 %v263
    %v296 = vcvt.s32.f32 %v264
    %v297 = vcvt.s32.f32 %v265
    %v298 = vcvt.s32.f32 %v266
    %v299 = vcvt.s32.f32 %v267
    %v300 = vcvt.s32.f32 %v268
    %v301 = vcvt.s32.f32 %v269
    %v302 = vcvt.s32.f32 %v270
    %v303 = vcvt.s32.f32 %v271
    %v304 = vcvt.s32.f32 %v272
    %v305 = vcvt.s32.f32 %v273
    %v306 = vcvt.s32.f32 %v274
    %v307 = vcvt.s32.f32 %v275
    %v308 = vcvt.s32.f32 %v276
    %v309 = vcvt.s32.f32 %v277
    %v310 = vcvt.s32.f32 %v278
    %v311 = vcvt.s32.f32 %v279
    %v312 = vcvt.s32.f32 %v280
    %v313 = vcvt.s32.f32 %v281
    %v314 = vcvt.s32.f32 %v282
    %v315 = vcvt.s32.f32 %v283
    %v316 = vcvt.s32.f32 %v284
    %v317 = vcvt.s32.f32 %v285
    %v318 = vcvt.s32.f32 %v286
    %v319 = vcvt.s32.f32 %v287
    %v320 = vcvt.s32.f32 %v288
    %v321 = vcvt.s32.f32 %v289
    %v322 = vcvt.s32.f32 %v290
    %v323 = vcvt.s32.f32 %v291
    %v324 = vcvt.s32.f32 %v292
    %v325 = vpack.c.bf16 %v295, %v293
    %v326 = vpack.c.bf16 %v296, %v294
    %v327 = vpack.c.bf16 %v299, %v297
    %v328 = vpack.c.bf16 %v300, %v298
    %v329 = vpack.c.bf16 %v303, %v301
    %v330 = vpack.c.bf16 %v304, %v302
    %v331 = vpack.c.bf16 %v307, %v305
    %v332 = vpack.c.bf16 %v308, %v306
    %v333 = vpack.c.bf16 %v311, %v309
    %v334 = vpack.c.bf16 %v312, %v310
    %v335 = vpack.c.bf16 %v315, %v313
    %v336 = vpack.c.bf16 %v316, %v314
    %v337 = vpack.c.bf16 %v319, %v317
    %v338 = vpack.c.bf16 %v320, %v318
    %v339 = vpack.c.bf16 %v323, %v321
    %v340 = vpack.c.bf16 %v324, %v322
    %v341 = vld [vmem:[#allocation5] sm:$0x3]
    %v342 = vperm.slane %v341, 0
    %v343 = vperm.slane %v341, 1
    %vm344 = vcmp.eq.s32.totalorder %v342, %v210
    %vm345 = vcmp.eq.s32.totalorder %v343, %v210
    %vm346 = vcmp.eq.s32.totalorder %v342, %v211
    %vm347 = vcmp.eq.s32.totalorder %v343, %v211
    %vm348 = vcmp.eq.s32.totalorder %v342, %v212
    %vm349 = vcmp.eq.s32.totalorder %v343, %v212
    %vm350 = vcmp.eq.s32.totalorder %v342, %v213
    %vm351 = vcmp.eq.s32.totalorder %v343, %v213
    %vm352 = vcmp.eq.s32.totalorder %v342, %v214
    %vm353 = vcmp.eq.s32.totalorder %v343, %v214
    %vm354 = vcmp.eq.s32.totalorder %v342, %v215
    %vm355 = vcmp.eq.s32.totalorder %v343, %v215
    %vm356 = vcmp.eq.s32.totalorder %v342, %v216
    %vm357 = vcmp.eq.s32.totalorder %v343, %v216
    %vm358 = vcmp.eq.s32.totalorder %v342, %v217
    %vm359 = vcmp.eq.s32.totalorder %v343, %v217
    %vm360 = vcmp.eq.s32.totalorder %v342, %v218
    %vm361 = vcmp.eq.s32.totalorder %v343, %v218
    %vm362 = vcmp.eq.s32.totalorder %v342, %v219
    %vm363 = vcmp.eq.s32.totalorder %v343, %v219
    %vm364 = vcmp.eq.s32.totalorder %v342, %v220
    %vm365 = vcmp.eq.s32.totalorder %v343, %v220
    %vm366 = vcmp.eq.s32.totalorder %v342, %v221
    %vm367 = vcmp.eq.s32.totalorder %v343, %v221
    %vm368 = vcmp.eq.s32.totalorder %v342, %v222
    %vm369 = vcmp.eq.s32.totalorder %v343, %v222
    %vm370 = vcmp.eq.s32.totalorder %v342, %v223
    %vm371 = vcmp.eq.s32.totalorder %v343, %v223
    %vm372 = vcmp.eq.s32.totalorder %v342, %v224
    %vm373 = vcmp.eq.s32.totalorder %v343, %v224
    %vm374 = vcmp.eq.s32.totalorder %v342, %v225
    %vm375 = vcmp.eq.s32.totalorder %v343, %v225
    %v376 = vsel %vm344, 1, 0
    %v377 = vsel %vm345, 1, 0
    %v378 = vsel %vm346, 1, 0
    %v379 = vsel %vm347, 1, 0
    %v380 = vsel %vm348, 1, 0
    %v381 = vsel %vm349, 1, 0
    %v382 = vsel %vm350, 1, 0
    %v383 = vsel %vm351, 1, 0
    %v384 = vsel %vm352, 1, 0
    %v385 = vsel %vm353, 1, 0
    %v386 = vsel %vm354, 1, 0
    %v387 = vsel %vm355, 1, 0
    %v388 = vsel %vm356, 1, 0
    %v389 = vsel %vm357, 1, 0
    %v390 = vsel %vm358, 1, 0
    %v391 = vsel %vm359, 1, 0
    %v392 = vsel %vm360, 1, 0
    %v393 = vsel %vm361, 1, 0
    %v394 = vsel %vm362, 1, 0
    %v395 = vsel %vm363, 1, 0
    %v396 = vsel %vm364, 1, 0
    %v397 = vsel %vm365, 1, 0
    %v398 = vsel %vm366, 1, 0
    %v399 = vsel %vm367, 1, 0
    %v400 = vsel %vm368, 1, 0
    %v401 = vsel %vm369, 1, 0
    %v402 = vsel %vm370, 1, 0
    %v403 = vsel %vm371, 1, 0
    %v404 = vsel %vm372, 1, 0
    %v405 = vsel %vm373, 1, 0
    %v406 = vsel %vm374, 1, 0
    %v407 = vsel %vm375, 1, 0
    %v408 = vcvt.s32.f32 %v376
    %v409 = vcvt.s32.f32 %v377
    %v410 = vcvt.s32.f32 %v378
    %v411 = vcvt.s32.f32 %v379
    %v412 = vcvt.s32.f32 %v380
    %v413 = vcvt.s32.f32 %v381
    %v414 = vcvt.s32.f32 %v382
    %v415 = vcvt.s32.f32 %v383
    %v416 = vcvt.s32.f32 %v384
    %v417 = vcvt.s32.f32 %v385
    %v418 = vcvt.s32.f32 %v386
    %v419 = vcvt.s32.f32 %v387
    %v420 = vcvt.s32.f32 %v388
    %v421 = vcvt.s32.f32 %v389
    %v422 = vcvt.s32.f32 %v390
    %v423 = vcvt.s32.f32 %v391
    %v424 = vcvt.s32.f32 %v392
    %v425 = vcvt.s32.f32 %v393
    %v426 = vcvt.s32.f32 %v394
    %v427 = vcvt.s32.f32 %v395
    %v428 = vcvt.s32.f32 %v396
    %v429 = vcvt.s32.f32 %v397
    %v430 = vcvt.s32.f32 %v398
    %v431 = vcvt.s32.f32 %v399
    %v432 = vcvt.s32.f32 %v400
    %v433 = vcvt.s32.f32 %v401
    %v434 = vcvt.s32.f32 %v402
    %v435 = vcvt.s32.f32 %v403
    %v436 = vcvt.s32.f32 %v404
    %v437 = vcvt.s32.f32 %v405
    %v438 = vcvt.s32.f32 %v406
    %v439 = vcvt.s32.f32 %v407
    %v440 = vpack.c.bf16 %v410, %v408
    %v441 = vpack.c.bf16 %v411, %v409
    %v442 = vpack.c.bf16 %v414, %v412
    %v443 = vpack.c.bf16 %v415, %v413
    %v444 = vpack.c.bf16 %v418, %v416
    %v445 = vpack.c.bf16 %v419, %v417
    %v446 = vpack.c.bf16 %v422, %v420
    %v447 = vpack.c.bf16 %v423, %v421
    %v448 = vpack.c.bf16 %v426, %v424
    %v449 = vpack.c.bf16 %v427, %v425
    %v450 = vpack.c.bf16 %v430, %v428
    %v451 = vpack.c.bf16 %v431, %v429
    %v452 = vpack.c.bf16 %v434, %v432
    %v453 = vpack.c.bf16 %v435, %v433
    %v454 = vpack.c.bf16 %v438, %v436
    %v455 = vpack.c.bf16 %v439, %v437
    %v456 = vld [vmem:[#allocation10] sm:$0x3]
    %v457 = vperm.slane %v456, 0
    %v458 = vperm.slane %v456, 1
    %vm459 = vcmp.eq.s32.totalorder %v457, %v210
    %vm460 = vcmp.eq.s32.totalorder %v458, %v210
    %vm461 = vcmp.eq.s32.totalorder %v457, %v211
    %vm462 = vcmp.eq.s32.totalorder %v458, %v211
    %vm463 = vcmp.eq.s32.totalorder %v457, %v212
    %vm464 = vcmp.eq.s32.totalorder %v458, %v212
    %vm465 = vcmp.eq.s32.totalorder %v457, %v213
    %vm466 = vcmp.eq.s32.totalorder %v458, %v213
    %vm467 = vcmp.eq.s32.totalorder %v457, %v214
    %vm468 = vcmp.eq.s32.totalorder %v458, %v214
    %vm469 = vcmp.eq.s32.totalorder %v457, %v215
    %vm470 = vcmp.eq.s32.totalorder %v458, %v215
    %vm471 = vcmp.eq.s32.totalorder %v457, %v216
    %vm472 = vcmp.eq.s32.totalorder %v458, %v216
    %vm473 = vcmp.eq.s32.totalorder %v457, %v217
    %vm474 = vcmp.eq.s32.totalorder %v458, %v217
    %vm475 = vcmp.eq.s32.totalorder %v457, %v218
    %vm476 = vcmp.eq.s32.totalorder %v458, %v218
    %vm477 = vcmp.eq.s32.totalorder %v457, %v219
    %vm478 = vcmp.eq.s32.totalorder %v458, %v219
    %vm479 = vcmp.eq.s32.totalorder %v457, %v220
    %vm480 = vcmp.eq.s32.totalorder %v458, %v220
    %vm481 = vcmp.eq.s32.totalorder %v457, %v221
    %vm482 = vcmp.eq.s32.totalorder %v458, %v221
    %vm483 = vcmp.eq.s32.totalorder %v457, %v222
    %vm484 = vcmp.eq.s32.totalorder %v458, %v222
    %vm485 = vcmp.eq.s32.totalorder %v457, %v223
    %vm486 = vcmp.eq.s32.totalorder %v458, %v223
    %vm487 = vcmp.eq.s32.totalorder %v457, %v224
    %vm488 = vcmp.eq.s32.totalorder %v458, %v224
    %vm489 = vcmp.eq.s32.totalorder %v457, %v225
    %vm490 = vcmp.eq.s32.totalorder %v458, %v225
    %v491 = vsel %vm459, 1, 0
    %v492 = vsel %vm460, 1, 0
    %v493 = vsel %vm461, 1, 0
    %v494 = vsel %vm462, 1, 0
    %v495 = vsel %vm463, 1, 0
    %v496 = vsel %vm464, 1, 0
    %v497 = vsel %vm465, 1, 0
    %v498 = vsel %vm466, 1, 0
    %v499 = vsel %vm467, 1, 0
    %v500 = vsel %vm468, 1, 0
    %v501 = vsel %vm469, 1, 0
    %v502 = vsel %vm470, 1, 0
    %v503 = vsel %vm471, 1, 0
    %v504 = vsel %vm472, 1, 0
    %v505 = vsel %vm473, 1, 0
    %v506 = vsel %vm474, 1, 0
    %v507 = vsel %vm475, 1, 0
    %v508 = vsel %vm476, 1, 0
    %v509 = vsel %vm477, 1, 0
    %v510 = vsel %vm478, 1, 0
    %v511 = vsel %vm479, 1, 0
    %v512 = vsel %vm480, 1, 0
    %v513 = vsel %vm481, 1, 0
    %v514 = vsel %vm482, 1, 0
    %v515 = vsel %vm483, 1, 0
    %v516 = vsel %vm484, 1, 0
    %v517 = vsel %vm485, 1, 0
    %v518 = vsel %vm486, 1, 0
    %v519 = vsel %vm487, 1, 0
    %v520 = vsel %vm488, 1, 0
    %v521 = vsel %vm489, 1, 0
    %v522 = vsel %vm490, 1, 0
    %v523 = vcvt.s32.f32 %v491
    %v524 = vcvt.s32.f32 %v492
    %v525 = vcvt.s32.f32 %v493
    %v526 = vcvt.s32.f32 %v494
    %v527 = vcvt.s32.f32 %v495
    %v528 = vcvt.s32.f32 %v496
    %v529 = vcvt.s32.f32 %v497
    %v530 = vcvt.s32.f32 %v498
    %v531 = vcvt.s32.f32 %v499
    %v532 = vcvt.s32.f32 %v500
    %v533 = vcvt.s32.f32 %v501
    %v534 = vcvt.s32.f32 %v502
    %v535 = vcvt.s32.f32 %v503
    %v536 = vcvt.s32.f32 %v504
    %v537 = vcvt.s32.f32 %v505
    %v538 = vcvt.s32.f32 %v506
    %v539 = vcvt.s32.f32 %v507
    %v540 = vcvt.s32.f32 %v508
    %v541 = vcvt.s32.f32 %v509
    %v542 = vcvt.s32.f32 %v510
    %v543 = vcvt.s32.f32 %v511
    %v544 = vcvt.s32.f32 %v512
    %v545 = vcvt.s32.f32 %v513
    %v546 = vcvt.s32.f32 %v514
    %v547 = vcvt.s32.f32 %v515
    %v548 = vcvt.s32.f32 %v516
    %v549 = vcvt.s32.f32 %v517
    %v550 = vcvt.s32.f32 %v518
    %v551 = vcvt.s32.f32 %v519
    %v552 = vcvt.s32.f32 %v520
    %v553 = vcvt.s32.f32 %v521
    %v554 = vcvt.s32.f32 %v522
    %v555 = vpack.c.bf16 %v524, %v523
    %v556 = vpack.c.bf16 %v526, %v525
    %v557 = vpack.c.bf16 %v528, %v527
    %v558 = vpack.c.bf16 %v530, %v529
    %v559 = vpack.c.bf16 %v532, %v531
    %v560 = vpack.c.bf16 %v534, %v533
    %v561 = vpack.c.bf16 %v536, %v535
    %v562 = vpack.c.bf16 %v538, %v537
    %v563 = vpack.c.bf16 %v540, %v539
    %v564 = vpack.c.bf16 %v542, %v541
    %v565 = vpack.c.bf16 %v544, %v543
    %v566 = vpack.c.bf16 %v546, %v545
    %v567 = vpack.c.bf16 %v548, %v547
    %v568 = vpack.c.bf16 %v550, %v549
    %v569 = vpack.c.bf16 %v552, %v551
    %v570 = vpack.c.bf16 %v554, %v553
    %v571 = vld [vmem:[%s3] sm:$0x3]
    %v572 = vperm.slane %v571, 0
    %v573 = vperm.slane %v571, 1
    %vm574 = vcmp.eq.s32.totalorder %v572, %v210
    %vm575 = vcmp.eq.s32.totalorder %v573, %v210
    %vm576 = vcmp.eq.s32.totalorder %v572, %v211
    %vm577 = vcmp.eq.s32.totalorder %v573, %v211
    %vm578 = vcmp.eq.s32.totalorder %v572, %v212
    %vm579 = vcmp.eq.s32.totalorder %v573, %v212
    %vm580 = vcmp.eq.s32.totalorder %v572, %v213
    %vm581 = vcmp.eq.s32.totalorder %v573, %v213
    %vm582 = vcmp.eq.s32.totalorder %v572, %v214
    %vm583 = vcmp.eq.s32.totalorder %v573, %v214
    %vm584 = vcmp.eq.s32.totalorder %v572, %v215
    %vm585 = vcmp.eq.s32.totalorder %v573, %v215
    %vm586 = vcmp.eq.s32.totalorder %v572, %v216
    %vm587 = vcmp.eq.s32.totalorder %v573, %v216
    %vm588 = vcmp.eq.s32.totalorder %v572, %v217
    %vm589 = vcmp.eq.s32.totalorder %v573, %v217
    %vm590 = vcmp.eq.s32.totalorder %v572, %v218
    %vm591 = vcmp.eq.s32.totalorder %v573, %v218
    %vm592 = vcmp.eq.s32.totalorder %v572, %v219
    %vm593 = vcmp.eq.s32.totalorder %v573, %v219
    %vm594 = vcmp.eq.s32.totalorder %v572, %v220
    %vm595 = vcmp.eq.s32.totalorder %v573, %v220
    %vm596 = vcmp.eq.s32.totalorder %v572, %v221
    %vm597 = vcmp.eq.s32.totalorder %v573, %v221
    %vm598 = vcmp.eq.s32.totalorder %v572, %v222
    %vm599 = vcmp.eq.s32.totalorder %v573, %v222
    %vm600 = vcmp.eq.s32.totalorder %v572, %v223
    %vm601 = vcmp.eq.s32.totalorder %v573, %v223
    %vm602 = vcmp.eq.s32.totalorder %v572, %v224
    %vm603 = vcmp.eq.s32.totalorder %v573, %v224
    %vm604 = vcmp.eq.s32.totalorder %v572, %v225
    %vm605 = vcmp.eq.s32.totalorder %v573, %v225
    %v606 = vsel %vm574, 1, 0
    %v607 = vsel %vm575, 1, 0
    %v608 = vsel %vm576, 1, 0
    %v609 = vsel %vm577, 1, 0
    %v610 = vsel %vm578, 1, 0
    %v611 = vsel %vm579, 1, 0
    %v612 = vsel %vm580, 1, 0
    %v613 = vsel %vm581, 1, 0
    %v614 = vsel %vm582, 1, 0
    %v615 = vsel %vm583, 1, 0
    %v616 = vsel %vm584, 1, 0
    %v617 = vsel %vm585, 1, 0
    %v618 = vsel %vm586, 1, 0
    %v619 = vsel %vm587, 1, 0
    %v620 = vsel %vm588, 1, 0
    %v621 = vsel %vm589, 1, 0
    %v622 = vsel %vm590, 1, 0
    %v623 = vsel %vm591, 1, 0
    %v624 = vsel %vm592, 1, 0
    %v625 = vsel %vm593, 1, 0
    %v626 = vsel %vm594, 1, 0
    %v627 = vsel %vm595, 1, 0
    %v628 = vsel %vm596, 1, 0
    %v629 = vsel %vm597, 1, 0
    %v630 = vsel %vm598, 1, 0
    %v631 = vsel %vm599, 1, 0
    %v632 = vsel %vm600, 1, 0
    %v633 = vsel %vm601, 1, 0
    %v634 = vsel %vm602, 1, 0
    %v635 = vsel %vm603, 1, 0
    %v636 = vsel %vm604, 1, 0
    %v637 = vsel %vm605, 1, 0
    %v638 = vcvt.s32.f32 %v606
    %v639 = vcvt.s32.f32 %v607
    %v640 = vcvt.s32.f32 %v608
    %v641 = vcvt.s32.f32 %v609
    %v642 = vcvt.s32.f32 %v610
    %v643 = vcvt.s32.f32 %v611
    %v644 = vcvt.s32.f32 %v612
    %v645 = vcvt.s32.f32 %v613
    %v646 = vcvt.s32.f32 %v614
    %v647 = vcvt.s32.f32 %v615
    %v648 = vcvt.s32.f32 %v616
    %v649 = vcvt.s32.f32 %v617
    %v650 = vcvt.s32.f32 %v618
    %v651 = vcvt.s32.f32 %v619
    %v652 = vcvt.s32.f32 %v620
    %v653 = vcvt.s32.f32 %v621
    %v654 = vcvt.s32.f32 %v622
    %v655 = vcvt.s32.f32 %v623
    %v656 = vcvt.s32.f32 %v624
    %v657 = vcvt.s32.f32 %v625
    %v658 = vcvt.s32.f32 %v626
    %v659 = vcvt.s32.f32 %v627
    %v660 = vcvt.s32.f32 %v628
    %v661 = vcvt.s32.f32 %v629
    %v662 = vcvt.s32.f32 %v630
    %v663 = vcvt.s32.f32 %v631
    %v664 = vcvt.s32.f32 %v632
    %v665 = vcvt.s32.f32 %v633
    %v666 = vcvt.s32.f32 %v634
    %v667 = vcvt.s32.f32 %v635
    %v668 = vcvt.s32.f32 %v636
    %v669 = vcvt.s32.f32 %v637
    %v670 = vpack.c.bf16 %v639, %v638
    %v671 = vpack.c.bf16 %v641, %v640
    %v672 = vpack.c.bf16 %v643, %v642
    %v673 = vpack.c.bf16 %v645, %v644
    %v674 = vpack.c.bf16 %v647, %v646
    %v675 = vpack.c.bf16 %v649, %v648
    %v676 = vpack.c.bf16 %v651, %v650
    %v677 = vpack.c.bf16 %v653, %v652
    %v678 = vpack.c.bf16 %v655, %v654
    %v679 = vpack.c.bf16 %v657, %v656
    %v680 = vpack.c.bf16 %v659, %v658
    %v681 = vpack.c.bf16 %v661, %v660
    %v682 = vpack.c.bf16 %v663, %v662
    %v683 = vpack.c.bf16 %v665, %v664
    %v684 = vpack.c.bf16 %v667, %v666
    %v685 = vpack.c.bf16 %v669, %v668
    %v686 = vunpack.c.l.bf16 %v555
    %v687 = vunpack.c.h.bf16 %v555
    %v688 = vunpack.c.l.bf16 %v556
    %v689 = vunpack.c.h.bf16 %v556
    %v690 = vunpack.c.l.bf16 %v557
    %v691 = vunpack.c.h.bf16 %v557
    %v692 = vunpack.c.l.bf16 %v558
    %v693 = vunpack.c.h.bf16 %v558
    %v694 = vunpack.c.l.bf16 %v559
    %v695 = vunpack.c.h.bf16 %v559
    %v696 = vunpack.c.l.bf16 %v560
    %v697 = vunpack.c.h.bf16 %v560
    %v698 = vunpack.c.l.bf16 %v561
    %v699 = vunpack.c.h.bf16 %v561
    %v700 = vunpack.c.l.bf16 %v562
    %v701 = vunpack.c.h.bf16 %v562
    %v702 = vunpack.c.l.bf16 %v563
    %v703 = vunpack.c.h.bf16 %v563
    %v704 = vunpack.c.l.bf16 %v564
    %v705 = vunpack.c.h.bf16 %v564
    %v706 = vunpack.c.l.bf16 %v565
    %v707 = vunpack.c.h.bf16 %v565
    %v708 = vunpack.c.l.bf16 %v566
    %v709 = vunpack.c.h.bf16 %v566
    %v710 = vunpack.c.l.bf16 %v567
    %v711 = vunpack.c.h.bf16 %v567
    %v712 = vunpack.c.l.bf16 %v568
    %v713 = vunpack.c.h.bf16 %v568
    %v714 = vunpack.c.l.bf16 %v569
    %v715 = vunpack.c.h.bf16 %v569
    %v716 = vunpack.c.l.bf16 %v570
    %v717 = vunpack.c.h.bf16 %v570
    %v718 = vunpack.c.l.bf16 %v670
    %v719 = vunpack.c.h.bf16 %v670
    %v720 = vunpack.c.l.bf16 %v671
    %v721 = vunpack.c.h.bf16 %v671
    %v722 = vunpack.c.l.bf16 %v672
    %v723 = vunpack.c.h.bf16 %v672
    %v724 = vunpack.c.l.bf16 %v673
    %v725 = vunpack.c.h.bf16 %v673
    %v726 = vunpack.c.l.bf16 %v674
    %v727 = vunpack.c.h.bf16 %v674
    %v728 = vunpack.c.l.bf16 %v675
    %v729 = vunpack.c.h.bf16 %v675
    %v730 = vunpack.c.l.bf16 %v676
    %v731 = vunpack.c.h.bf16 %v676
    %v732 = vunpack.c.l.bf16 %v677
    %v733 = vunpack.c.h.bf16 %v677
    %v734 = vunpack.c.l.bf16 %v678
    %v735 = vunpack.c.h.bf16 %v678
    %v736 = vunpack.c.l.bf16 %v679
    %v737 = vunpack.c.h.bf16 %v679
    %v738 = vunpack.c.l.bf16 %v680
    %v739 = vunpack.c.h.bf16 %v680
    %v740 = vunpack.c.l.bf16 %v681
    %v741 = vunpack.c.h.bf16 %v681
    %v742 = vunpack.c.l.bf16 %v682
    %v743 = vunpack.c.h.bf16 %v682
    %v744 = vunpack.c.l.bf16 %v683
    %v745 = vunpack.c.h.bf16 %v683
    %v746 = vunpack.c.l.bf16 %v684
    %v747 = vunpack.c.h.bf16 %v684
    %v748 = vunpack.c.l.bf16 %v685
    %v749 = vunpack.c.h.bf16 %v685
    %v750 = vadd.f32 %v686, %v718
    %v751 = vadd.f32 %v687, %v719
    %v752 = vadd.f32 %v688, %v720
    %v753 = vadd.f32 %v689, %v721
    %v754 = vadd.f32 %v690, %v722
    %v755 = vadd.f32 %v691, %v723
    %v756 = vadd.f32 %v692, %v724
    %v757 = vadd.f32 %v693, %v725
    %v758 = vadd.f32 %v694, %v726
    %v759 = vadd.f32 %v695, %v727
    %v760 = vadd.f32 %v696, %v728
    %v761 = vadd.f32 %v697, %v729
    %v762 = vadd.f32 %v698, %v730
    %v763 = vadd.f32 %v699, %v731
    %v764 = vadd.f32 %v700, %v732
    %v765 = vadd.f32 %v701, %v733
    %v766 = vadd.f32 %v702, %v734
    %v767 = vadd.f32 %v703, %v735
    %v768 = vadd.f32 %v704, %v736
    %v769 = vadd.f32 %v705, %v737
    %v770 = vadd.f32 %v706, %v738
    %v771 = vadd.f32 %v707, %v739
    %v772 = vadd.f32 %v708, %v740
    %v773 = vadd.f32 %v709, %v741
    %v774 = vadd.f32 %v710, %v742
    %v775 = vadd.f32 %v711, %v743
    %v776 = vadd.f32 %v712, %v744
    %v777 = vadd.f32 %v713, %v745
    %v778 = vadd.f32 %v714, %v746
    %v779 = vadd.f32 %v715, %v747
    %v780 = vadd.f32 %v716, %v748
    %v781 = vadd.f32 %v717, %v749
    %v782 = vpack.c.bf16 %v752, %v750
    %v783 = vpack.c.bf16 %v753, %v751
    %v784 = vpack.c.bf16 %v756, %v754
    %v785 = vpack.c.bf16 %v757, %v755
    %v786 = vpack.c.bf16 %v760, %v758
    %v787 = vpack.c.bf16 %v761, %v759
    %v788 = vpack.c.bf16 %v764, %v762
    %v789 = vpack.c.bf16 %v765, %v763
    %v790 = vpack.c.bf16 %v768, %v766
    %v791 = vpack.c.bf16 %v769, %v767
    %v792 = vpack.c.bf16 %v772, %v770
    %v793 = vpack.c.bf16 %v773, %v771
    %v794 = vpack.c.bf16 %v776, %v774
    %v795 = vpack.c.bf16 %v777, %v775
    %v796 = vpack.c.bf16 %v780, %v778
    %v797 = vpack.c.bf16 %v781, %v779
    %v798 = vld [vmem:[#allocation11] sm:$0xf]
    %v799 = vld [vmem:[#allocation11 + $0x4] sm:$0xf]
    %v800 = vld [vmem:[#allocation11 + $0x8] sm:$0xf]
    %v801 = vld [vmem:[#allocation11 + $0xc] sm:$0xf]
    %v802 = vld [vmem:[#allocation11 + $0x10] sm:$0xf]
    %v803 = vld [vmem:[#allocation11 + $0x14] sm:$0xf]
    %v804 = vld [vmem:[#allocation11 + $0x18] sm:$0xf]
    %v805 = vld [vmem:[#allocation11 + $0x1c] sm:$0xf]
    %v806 = vld [vmem:[#allocation11 + $0x20] sm:$0xf]
    %v807 = vld [vmem:[#allocation11 + $0x24] sm:$0xf]
    %v808 = vld [vmem:[#allocation11 + $0x28] sm:$0xf]
    %v809 = vld [vmem:[#allocation11 + $0x2c] sm:$0xf]
    %v810 = vld [vmem:[#allocation11 + $0x30] sm:$0xf]
    %v811 = vld [vmem:[#allocation11 + $0x34] sm:$0xf]
    %v812 = vld [vmem:[#allocation11 + $0x38] sm:$0xf]
    %v813 = vld [vmem:[#allocation11 + $0x3c] sm:$0xf]
    %v814 = vld [vmem:[#allocation11 + $0x40] sm:$0xf]
    %v815 = vld [vmem:[#allocation11 + $0x44] sm:$0xf]
    %v816 = vld [vmem:[#allocation11 + $0x48] sm:$0xf]
    %v817 = vld [vmem:[#allocation11 + $0x4c] sm:$0xf]
    %v818 = vld [vmem:[#allocation11 + $0x50] sm:$0xf]
    %v819 = vld [vmem:[#allocation11 + $0x54] sm:$0xf]
    %v820 = vld [vmem:[#allocation11 + $0x58] sm:$0xf]
    %v821 = vld [vmem:[#allocation11 + $0x5c] sm:$0xf]
    %v822 = vld [vmem:[#allocation11 + $0x60] sm:$0xf]
    %v823 = vld [vmem:[#allocation11 + $0x64] sm:$0xf]
    %v824 = vld [vmem:[#allocation11 + $0x68] sm:$0xf]
    %v825 = vld [vmem:[#allocation11 + $0x6c] sm:$0xf]
    %v826 = vld [vmem:[#allocation11 + $0x70] sm:$0xf]
    %v827 = vld [vmem:[#allocation11 + $0x74] sm:$0xf]
    %v828 = vld [vmem:[#allocation11 + $0x78] sm:$0xf]
    %v829 = vld [vmem:[#allocation11 + $0x7c] sm:$0xf]
    %v830 = vld [vmem:[#allocation13] sm:$0xf]
    %v831 = vld [vmem:[#allocation13 + $0x4] sm:$0xf]
    %v832 = vld [vmem:[#allocation13 + $0x8] sm:$0xf]
    %v833 = vld [vmem:[#allocation13 + $0xc] sm:$0xf]
    %v834 = vld [vmem:[#allocation13 + $0x10] sm:$0xf]
    %v835 = vld [vmem:[#allocation13 + $0x14] sm:$0xf]
    %v836 = vld [vmem:[#allocation13 + $0x18] sm:$0xf]
    %v837 = vld [vmem:[#allocation13 + $0x1c] sm:$0xf]
    %v838 = vld [vmem:[#allocation13 + $0x20] sm:$0xf]
    %v839 = vld [vmem:[#allocation13 + $0x24] sm:$0xf]
    %v840 = vld [vmem:[#allocation13 + $0x28] sm:$0xf]
    %v841 = vld [vmem:[#allocation13 + $0x2c] sm:$0xf]
    %v842 = vld [vmem:[#allocation13 + $0x30] sm:$0xf]
    %v843 = vld [vmem:[#allocation13 + $0x34] sm:$0xf]
    %v844 = vld [vmem:[#allocation13 + $0x38] sm:$0xf]
    %v845 = vld [vmem:[#allocation13 + $0x3c] sm:$0xf]
    %v846 = vld [vmem:[#allocation13 + $0x40] sm:$0xf]
    %v847 = vld [vmem:[#allocation13 + $0x44] sm:$0xf]
    %v848 = vld [vmem:[#allocation13 + $0x48] sm:$0xf]
    %v849 = vld [vmem:[#allocation13 + $0x4c] sm:$0xf]
    %v850 = vld [vmem:[#allocation13 + $0x50] sm:$0xf]
    %v851 = vld [vmem:[#allocation13 + $0x54] sm:$0xf]
    %v852 = vld [vmem:[#allocation13 + $0x58] sm:$0xf]
    %v853 = vld [vmem:[#allocation13 + $0x5c] sm:$0xf]
    %v854 = vld [vmem:[#allocation13 + $0x60] sm:$0xf]
    %v855 = vld [vmem:[#allocation13 + $0x64] sm:$0xf]
    %v856 = vld [vmem:[#allocation13 + $0x68] sm:$0xf]
    %v857 = vld [vmem:[#allocation13 + $0x6c] sm:$0xf]
    %v858 = vld [vmem:[#allocation13 + $0x70] sm:$0xf]
    %v859 = vld [vmem:[#allocation13 + $0x74] sm:$0xf]
    %v860 = vld [vmem:[#allocation13 + $0x78] sm:$0xf]
    %v861 = vld [vmem:[#allocation13 + $0x7c] sm:$0xf]
    %v862 = vld [vmem:[#allocation2] sm:$0xff]
    %v863 = vld [vmem:[#allocation2 + $0x8] sm:$0xff]
    %v864 = vld [vmem:[#allocation2 + $0x10] sm:$0xff]
    %v865 = vld [vmem:[#allocation2 + $0x18] sm:$0xff]
    %v866 = vld [vmem:[#allocation2 + $0x20] sm:$0xff]
    %v867 = vld [vmem:[#allocation2 + $0x28] sm:$0xff]
    %v868 = vld [vmem:[#allocation2 + $0x30] sm:$0xff]
    %v869 = vld [vmem:[#allocation2 + $0x38] sm:$0xff]
    %v870 = vld [vmem:[#allocation2 + $0x40] sm:$0xff]
    %v871 = vld [vmem:[#allocation2 + $0x48] sm:$0xff]
    %v872 = vld [vmem:[#allocation2 + $0x50] sm:$0xff]
    %v873 = vld [vmem:[#allocation2 + $0x58] sm:$0xff]
    %v874 = vld [vmem:[#allocation2 + $0x60] sm:$0xff]
    %v875 = vld [vmem:[#allocation2 + $0x68] sm:$0xff]
    %v876 = vld [vmem:[#allocation2 + $0x70] sm:$0xff]
    %v877 = vld [vmem:[#allocation2 + $0x78] sm:$0xff]
    %v910 = vunpack.c.l.b16 %v798
    %v911 = vunpack.c.l.b16 %v799
    %v912 = vunpack.c.l.b16 %v800
    %v913 = vunpack.c.l.b16 %v801
    %v914 = vunpack.c.l.b16 %v802
    %v915 = vunpack.c.l.b16 %v803
    %v916 = vunpack.c.l.b16 %v804
    %v917 = vunpack.c.l.b16 %v805
    %v918 = vunpack.c.l.b16 %v806
    %v919 = vunpack.c.l.b16 %v807
    %v920 = vunpack.c.l.b16 %v808
    %v921 = vunpack.c.l.b16 %v809
    %v922 = vunpack.c.l.b16 %v810
    %v923 = vunpack.c.l.b16 %v811
    %v924 = vunpack.c.l.b16 %v812
    %v925 = vunpack.c.l.b16 %v813
    %v926 = vunpack.c.l.b16 %v814
    %v927 = vunpack.c.l.b16 %v815
    %v928 = vunpack.c.l.b16 %v816
    %v929 = vunpack.c.l.b16 %v817
    %v930 = vunpack.c.l.b16 %v818
    %v931 = vunpack.c.l.b16 %v819
    %v932 = vunpack.c.l.b16 %v820
    %v933 = vunpack.c.l.b16 %v821
    %v934 = vunpack.c.l.b16 %v822
    %v935 = vunpack.c.l.b16 %v823
    %v936 = vunpack.c.l.b16 %v824
    %v937 = vunpack.c.l.b16 %v825
    %v938 = vunpack.c.l.b16 %v826
    %v939 = vunpack.c.l.b16 %v827
    %v940 = vunpack.c.l.b16 %v828
    %v941 = vunpack.c.l.b16 %v829
    %v942 = vpack.c.b16 %v911, %v910
    %v943 = vpack.c.b16 %v913, %v912
    %v944 = vpack.c.b16 %v915, %v914
    %v945 = vpack.c.b16 %v917, %v916
    %v946 = vpack.c.b16 %v919, %v918
    %v947 = vpack.c.b16 %v921, %v920
    %v948 = vpack.c.b16 %v923, %v922
    %v949 = vpack.c.b16 %v925, %v924
    %v950 = vpack.c.b16 %v927, %v926
    %v951 = vpack.c.b16 %v929, %v928
    %v952 = vpack.c.b16 %v931, %v930
    %v953 = vpack.c.b16 %v933, %v932
    %v954 = vpack.c.b16 %v935, %v934
    %v955 = vpack.c.b16 %v937, %v936
    %v956 = vpack.c.b16 %v939, %v938
    %v957 = vpack.c.b16 %v941, %v940
    %974 = vmatpush.bf16.msra.mxu0 %v949
    %975 = vmatpush.bf16.msra.mxu0 %v948
    %976 = vmatpush.bf16.msra.mxu0 %v947
    %977 = vmatpush.bf16.msra.mxu0 %v946
    %978 = vmatpush.bf16.msra.mxu0 %v945
    %979 = vmatpush.bf16.msra.mxu0 %v944
    %980 = vmatpush.bf16.msra.mxu0 %v943
    %981 = vmatpush.bf16.msra.mxu0 %v942
    %982 = vmatmul.bf16.gmra.mxu0 %v325
    %v983 = vpop.f32.mrf.mxu0
    %v984 = vadd.f32 0.0, %v983
    %v985 = vpop.f32.mrf.mxu0
    %v986 = vadd.f32 0.0, %v985
    %987 = vmatmul.bf16.gmra.mxu0 %v327
    %v988 = vpop.f32.mrf.mxu0
    %v989 = vadd.f32 0.0, %v988
    %v990 = vpop.f32.mrf.mxu0
    %v991 = vadd.f32 0.0, %v990
    %992 = vmatmul.bf16.gmra.mxu0 %v329
    %v993 = vpop.f32.mrf.mxu0
    %v994 = vadd.f32 0.0, %v993
    %v995 = vpop.f32.mrf.mxu0
    %v996 = vadd.f32 0.0, %v995
    %997 = vmatmul.bf16.gmra.mxu0 %v331
    %v998 = vpop.f32.mrf.mxu0
    %v999 = vadd.f32 0.0, %v998
    %v1000 = vpop.f32.mrf.mxu0
    %v1001 = vadd.f32 0.0, %v1000
    %1002 = vmatmul.bf16.gmra.mxu0 %v333
    %v1003 = vpop.f32.mrf.mxu0
    %v1004 = vadd.f32 0.0, %v1003
    %v1005 = vpop.f32.mrf.mxu0
    %v1006 = vadd.f32 0.0, %v1005
    %1007 = vmatmul.bf16.gmra.mxu0 %v335
    %v1008 = vpop.f32.mrf.mxu0
    %v1009 = vadd.f32 0.0, %v1008
    %v1010 = vpop.f32.mrf.mxu0
    %v1011 = vadd.f32 0.0, %v1010
    %1012 = vmatmul.bf16.gmra.mxu0 %v337
    %v1013 = vpop.f32.mrf.mxu0
    %v1014 = vadd.f32 0.0, %v1013
    %v1015 = vpop.f32.mrf.mxu0
    %v1016 = vadd.f32 0.0, %v1015
    %1017 = vmatmul.bf16.gmra.mxu0 %v339
    %v1018 = vpop.f32.mrf.mxu0
    %v1019 = vadd.f32 0.0, %v1018
    %v1020 = vpop.f32.mrf.mxu0
    %v1021 = vadd.f32 0.0, %v1020
    %1022 = vdwg.mxu0
    %1023 = vmatpush.bf16.msra.mxu0 %v957
    %1024 = vmatpush.bf16.msra.mxu0 %v956
    %1025 = vmatpush.bf16.msra.mxu0 %v955
    %1026 = vmatpush.bf16.msra.mxu0 %v954
    %1027 = vmatpush.bf16.msra.mxu0 %v953
    %1028 = vmatpush.bf16.msra.mxu0 %v952
    %1029 = vmatpush.bf16.msra.mxu0 %v951
    %1030 = vmatpush.bf16.msra.mxu0 %v950
    %1031 = vmatmul.bf16.gmra.mxu0 %v326
    %v1032 = vpop.f32.mrf.mxu0
    %v1033 = vadd.f32 %v984, %v1032
    %v1034 = vpop.f32.mrf.mxu0
    %v1035 = vadd.f32 %v986, %v1034
    %1036 = vmatmul.bf16.gmra.mxu0 %v328
    %v1037 = vpop.f32.mrf.mxu0
    %v1038 = vadd.f32 %v989, %v1037
    %v1039 = vpop.f32.mrf.mxu0
    %v1040 = vadd.f32 %v991, %v1039
    %1041 = vmatmul.bf16.gmra.mxu0 %v330
    %v1042 = vpop.f32.mrf.mxu0
    %v1043 = vadd.f32 %v994, %v1042
    %v1044 = vpop.f32.mrf.mxu0
    %v1045 = vadd.f32 %v996, %v1044
    %1046 = vmatmul.bf16.gmra.mxu0 %v332
    %v1047 = vpop.f32.mrf.mxu0
    %v1048 = vadd.f32 %v999, %v1047
    %v1049 = vpop.f32.mrf.mxu0
    %v1050 = vadd.f32 %v1001, %v1049
    %1051 = vmatmul.bf16.gmra.mxu0 %v334
    %v1052 = vpop.f32.mrf.mxu0
    %v1053 = vadd.f32 %v1004, %v1052
    %v1054 = vpop.f32.mrf.mxu0
    %v1055 = vadd.f32 %v1006, %v1054
    %1056 = vmatmul.bf16.gmra.mxu0 %v336
    %v1057 = vpop.f32.mrf.mxu0
    %v1058 = vadd.f32 %v1009, %v1057
    %v1059 = vpop.f32.mrf.mxu0
    %v1060 = vadd.f32 %v1011, %v1059
    %1061 = vmatmul.bf16.gmra.mxu0 %v338
    %v1062 = vpop.f32.mrf.mxu0
    %v1063 = vadd.f32 %v1014, %v1062
    %v1064 = vpop.f32.mrf.mxu0
    %v1065 = vadd.f32 %v1016, %v1064
    %1066 = vmatmul.bf16.gmra.mxu0 %v340
    %v1067 = vpop.f32.mrf.mxu0
    %v1068 = vadd.f32 %v1019, %v1067
    %v1069 = vpop.f32.mrf.mxu0
    %v1070 = vadd.f32 %v1021, %v1069
    %1071 = vdwg.mxu0
    %v1072 = vadd.f32 %v862, %v1033
    %v1073 = vadd.f32 %v863, %v1035
    %v1074 = vadd.f32 %v864, %v1038
    %v1075 = vadd.f32 %v865, %v1040
    %v1076 = vadd.f32 %v866, %v1043
    %v1077 = vadd.f32 %v867, %v1045
    %v1078 = vadd.f32 %v868, %v1048
    %v1079 = vadd.f32 %v869, %v1050
    %v1080 = vadd.f32 %v870, %v1053
    %v1081 = vadd.f32 %v871, %v1055
    %v1082 = vadd.f32 %v872, %v1058
    %v1083 = vadd.f32 %v873, %v1060
    %v1084 = vadd.f32 %v874, %v1063
    %v1085 = vadd.f32 %v875, %v1065
    %v1086 = vadd.f32 %v876, %v1068
    %v1087 = vadd.f32 %v877, %v1070
    %1088 = vst [vmem:[#allocation2] sm:$0xff] %v1072
    %1089 = vst [vmem:[#allocation2 + $0x8] sm:$0xff] %v1073
    %1090 = vst [vmem:[#allocation2 + $0x10] sm:$0xff] %v1074
    %1091 = vst [vmem:[#allocation2 + $0x18] sm:$0xff] %v1075
    %1092 = vst [vmem:[#allocation2 + $0x20] sm:$0xff] %v1076
    %1093 = vst [vmem:[#allocation2 + $0x28] sm:$0xff] %v1077
    %1094 = vst [vmem:[#allocation2 + $0x30] sm:$0xff] %v1078
    %1095 = vst [vmem:[#allocation2 + $0x38] sm:$0xff] %v1079
    %1096 = vst [vmem:[#allocation2 + $0x40] sm:$0xff] %v1080
    %1097 = vst [vmem:[#allocation2 + $0x48] sm:$0xff] %v1081
    %1098 = vst [vmem:[#allocation2 + $0x50] sm:$0xff] %v1082
    %1099 = vst [vmem:[#allocation2 + $0x58] sm:$0xff] %v1083
    %1100 = vst [vmem:[#allocation2 + $0x60] sm:$0xff] %v1084
    %1101 = vst [vmem:[#allocation2 + $0x68] sm:$0xff] %v1085
    %1102 = vst [vmem:[#allocation2 + $0x70] sm:$0xff] %v1086
    %1103 = vst [vmem:[#allocation2 + $0x78] sm:$0xff] %v1087
    %v1104 = vld [vmem:[#allocation4] sm:$0xff]
    %v1105 = vld [vmem:[#allocation4 + $0x8] sm:$0xff]
    %v1106 = vld [vmem:[#allocation4 + $0x10] sm:$0xff]
    %v1107 = vld [vmem:[#allocation4 + $0x18] sm:$0xff]
    %v1108 = vld [vmem:[#allocation4 + $0x20] sm:$0xff]
    %v1109 = vld [vmem:[#allocation4 + $0x28] sm:$0xff]
    %v1110 = vld [vmem:[#allocation4 + $0x30] sm:$0xff]
    %v1111 = vld [vmem:[#allocation4 + $0x38] sm:$0xff]
    %v1112 = vld [vmem:[#allocation4 + $0x40] sm:$0xff]
    %v1113 = vld [vmem:[#allocation4 + $0x48] sm:$0xff]
    %v1114 = vld [vmem:[#allocation4 + $0x50] sm:$0xff]
    %v1115 = vld [vmem:[#allocation4 + $0x58] sm:$0xff]
    %v1116 = vld [vmem:[#allocation4 + $0x60] sm:$0xff]
    %v1117 = vld [vmem:[#allocation4 + $0x68] sm:$0xff]
    %v1118 = vld [vmem:[#allocation4 + $0x70] sm:$0xff]
    %v1119 = vld [vmem:[#allocation4 + $0x78] sm:$0xff]
    %1120 = vmatpush.bf16.msra.mxu0 %v949
    %1121 = vmatpush.bf16.msra.mxu0 %v948
    %1122 = vmatpush.bf16.msra.mxu0 %v947
    %1123 = vmatpush.bf16.msra.mxu0 %v946
    %1124 = vmatpush.bf16.msra.mxu0 %v945
    %1125 = vmatpush.bf16.msra.mxu0 %v944
    %1126 = vmatpush.bf16.msra.mxu0 %v943
    %1127 = vmatpush.bf16.msra.mxu0 %v942
    %1128 = vmatmul.bf16.gmra.mxu0 %v440
    %v1129 = vpop.f32.mrf.mxu0
    %v1130 = vadd.f32 0.0, %v1129
    %v1131 = vpop.f32.mrf.mxu0
    %v1132 = vadd.f32 0.0, %v1131
    %1133 = vmatmul.bf16.gmra.mxu0 %v442
    %v1134 = vpop.f32.mrf.mxu0
    %v1135 = vadd.f32 0.0, %v1134
    %v1136 = vpop.f32.mrf.mxu0
    %v1137 = vadd.f32 0.0, %v1136
    %1138 = vmatmul.bf16.gmra.mxu0 %v444
    %v1139 = vpop.f32.mrf.mxu0
    %v1140 = vadd.f32 0.0, %v1139
    %v1141 = vpop.f32.mrf.mxu0
    %v1142 = vadd.f32 0.0, %v1141
    %1143 = vmatmul.bf16.gmra.mxu0 %v446
    %v1144 = vpop.f32.mrf.mxu0
    %v1145 = vadd.f32 0.0, %v1144
    %v1146 = vpop.f32.mrf.mxu0
    %v1147 = vadd.f32 0.0, %v1146
    %1148 = vmatmul.bf16.gmra.mxu0 %v448
    %v1149 = vpop.f32.mrf.mxu0
    %v1150 = vadd.f32 0.0, %v1149
    %v1151 = vpop.f32.mrf.mxu0
    %v1152 = vadd.f32 0.0, %v1151
    %1153 = vmatmul.bf16.gmra.mxu0 %v450
    %v1154 = vpop.f32.mrf.mxu0
    %v1155 = vadd.f32 0.0, %v1154
    %v1156 = vpop.f32.mrf.mxu0
    %v1157 = vadd.f32 0.0, %v1156
    %1158 = vmatmul.bf16.gmra.mxu0 %v452
    %v1159 = vpop.f32.mrf.mxu0
    %v1160 = vadd.f32 0.0, %v1159
    %v1161 = vpop.f32.mrf.mxu0
    %v1162 = vadd.f32 0.0, %v1161
    %1163 = vmatmul.bf16.gmra.mxu0 %v454
    %v1164 = vpop.f32.mrf.mxu0
    %v1165 = vadd.f32 0.0, %v1164
    %v1166 = vpop.f32.mrf.mxu0
    %v1167 = vadd.f32 0.0, %v1166
    %1168 = vdwg.mxu0
    %1169 = vmatpush.bf16.msra.mxu0 %v957
    %1170 = vmatpush.bf16.msra.mxu0 %v956
    %1171 = vmatpush.bf16.msra.mxu0 %v955
    %1172 = vmatpush.bf16.msra.mxu0 %v954
    %1173 = vmatpush.bf16.msra.mxu0 %v953
    %1174 = vmatpush.bf16.msra.mxu0 %v952
    %1175 = vmatpush.bf16.msra.mxu0 %v951
    %1176 = vmatpush.bf16.msra.mxu0 %v950
    %1177 = vmatmul.bf16.gmra.mxu0 %v441
    %v1178 = vpop.f32.mrf.mxu0
    %v1179 = vadd.f32 %v1130, %v1178
    %v1180 = vpop.f32.mrf.mxu0
    %v1181 = vadd.f32 %v1132, %v1180
    %1182 = vmatmul.bf16.gmra.mxu0 %v443
    %v1183 = vpop.f32.mrf.mxu0
    %v1184 = vadd.f32 %v1135, %v1183
    %v1185 = vpop.f32.mrf.mxu0
    %v1186 = vadd.f32 %v1137, %v1185
    %1187 = vmatmul.bf16.gmra.mxu0 %v445
    %v1188 = vpop.f32.mrf.mxu0
    %v1189 = vadd.f32 %v1140, %v1188
    %v1190 = vpop.f32.mrf.mxu0
    %v1191 = vadd.f32 %v1142, %v1190
    %1192 = vmatmul.bf16.gmra.mxu0 %v447
    %v1193 = vpop.f32.mrf.mxu0
    %v1194 = vadd.f32 %v1145, %v1193
    %v1195 = vpop.f32.mrf.mxu0
    %v1196 = vadd.f32 %v1147, %v1195
    %1197 = vmatmul.bf16.gmra.mxu0 %v449
    %v1198 = vpop.f32.mrf.mxu0
    %v1199 = vadd.f32 %v1150, %v1198
    %v1200 = vpop.f32.mrf.mxu0
    %v1201 = vadd.f32 %v1152, %v1200
    %1202 = vmatmul.bf16.gmra.mxu0 %v451
    %v1203 = vpop.f32.mrf.mxu0
    %v1204 = vadd.f32 %v1155, %v1203
    %v1205 = vpop.f32.mrf.mxu0
    %v1206 = vadd.f32 %v1157, %v1205
    %1207 = vmatmul.bf16.gmra.mxu0 %v453
    %v1208 = vpop.f32.mrf.mxu0
    %v1209 = vadd.f32 %v1160, %v1208
    %v1210 = vpop.f32.mrf.mxu0
    %v1211 = vadd.f32 %v1162, %v1210
    %1212 = vmatmul.bf16.gmra.mxu0 %v455
    %v1213 = vpop.f32.mrf.mxu0
    %v1214 = vadd.f32 %v1165, %v1213
    %v1215 = vpop.f32.mrf.mxu0
    %v1216 = vadd.f32 %v1167, %v1215
    %1217 = vdwg.mxu0
    %v1218 = vadd.f32 %v1104, %v1179
    %v1219 = vadd.f32 %v1105, %v1181
    %v1220 = vadd.f32 %v1106, %v1184
    %v1221 = vadd.f32 %v1107, %v1186
    %v1222 = vadd.f32 %v1108, %v1189
    %v1223 = vadd.f32 %v1109, %v1191
    %v1224 = vadd.f32 %v1110, %v1194
    %v1225 = vadd.f32 %v1111, %v1196
    %v1226 = vadd.f32 %v1112, %v1199
    %v1227 = vadd.f32 %v1113, %v1201
    %v1228 = vadd.f32 %v1114, %v1204
    %v1229 = vadd.f32 %v1115, %v1206
    %v1230 = vadd.f32 %v1116, %v1209
    %v1231 = vadd.f32 %v1117, %v1211
    %v1232 = vadd.f32 %v1118, %v1214
    %v1233 = vadd.f32 %v1119, %v1216
    %1234 = vst [vmem:[#allocation4] sm:$0xff] %v1218
    %1235 = vst [vmem:[#allocation4 + $0x8] sm:$0xff] %v1219
    %1236 = vst [vmem:[#allocation4 + $0x10] sm:$0xff] %v1220
    %1237 = vst [vmem:[#allocation4 + $0x18] sm:$0xff] %v1221
    %1238 = vst [vmem:[#allocation4 + $0x20] sm:$0xff] %v1222
    %1239 = vst [vmem:[#allocation4 + $0x28] sm:$0xff] %v1223
    %1240 = vst [vmem:[#allocation4 + $0x30] sm:$0xff] %v1224
    %1241 = vst [vmem:[#allocation4 + $0x38] sm:$0xff] %v1225
    %1242 = vst [vmem:[#allocation4 + $0x40] sm:$0xff] %v1226
    %1243 = vst [vmem:[#allocation4 + $0x48] sm:$0xff] %v1227
    %1244 = vst [vmem:[#allocation4 + $0x50] sm:$0xff] %v1228
    %1245 = vst [vmem:[#allocation4 + $0x58] sm:$0xff] %v1229
    %1246 = vst [vmem:[#allocation4 + $0x60] sm:$0xff] %v1230
    %1247 = vst [vmem:[#allocation4 + $0x68] sm:$0xff] %v1231
    %1248 = vst [vmem:[#allocation4 + $0x70] sm:$0xff] %v1232
    %1249 = vst [vmem:[#allocation4 + $0x78] sm:$0xff] %v1233
    %v1250 = vld [vmem:[#allocation3] sm:$0xff]
    %v1251 = vld [vmem:[#allocation3 + $0x8] sm:$0xff]
    %v1252 = vld [vmem:[#allocation3 + $0x10] sm:$0xff]
    %v1253 = vld [vmem:[#allocation3 + $0x18] sm:$0xff]
    %v1254 = vld [vmem:[#allocation3 + $0x20] sm:$0xff]
    %v1255 = vld [vmem:[#allocation3 + $0x28] sm:$0xff]
    %v1256 = vld [vmem:[#allocation3 + $0x30] sm:$0xff]
    %v1257 = vld [vmem:[#allocation3 + $0x38] sm:$0xff]
    %v1258 = vld [vmem:[#allocation3 + $0x40] sm:$0xff]
    %v1259 = vld [vmem:[#allocation3 + $0x48] sm:$0xff]
    %v1260 = vld [vmem:[#allocation3 + $0x50] sm:$0xff]
    %v1261 = vld [vmem:[#allocation3 + $0x58] sm:$0xff]
    %v1262 = vld [vmem:[#allocation3 + $0x60] sm:$0xff]
    %v1263 = vld [vmem:[#allocation3 + $0x68] sm:$0xff]
    %v1264 = vld [vmem:[#allocation3 + $0x70] sm:$0xff]
    %v1265 = vld [vmem:[#allocation3 + $0x78] sm:$0xff]
    %v1298 = vunpack.c.l.b16 %v830
    %v1299 = vunpack.c.l.b16 %v831
    %v1300 = vunpack.c.l.b16 %v832
    %v1301 = vunpack.c.l.b16 %v833
    %v1302 = vunpack.c.l.b16 %v834
    %v1303 = vunpack.c.l.b16 %v835
    %v1304 = vunpack.c.l.b16 %v836
    %v1305 = vunpack.c.l.b16 %v837
    %v1306 = vunpack.c.l.b16 %v838
    %v1307 = vunpack.c.l.b16 %v839
    %v1308 = vunpack.c.l.b16 %v840
    %v1309 = vunpack.c.l.b16 %v841
    %v1310 = vunpack.c.l.b16 %v842
    %v1311 = vunpack.c.l.b16 %v843
    %v1312 = vunpack.c.l.b16 %v844
    %v1313 = vunpack.c.l.b16 %v845
    %v1314 = vunpack.c.l.b16 %v846
    %v1315 = vunpack.c.l.b16 %v847
    %v1316 = vunpack.c.l.b16 %v848
    %v1317 = vunpack.c.l.b16 %v849
    %v1318 = vunpack.c.l.b16 %v850
    %v1319 = vunpack.c.l.b16 %v851
    %v1320 = vunpack.c.l.b16 %v852
    %v1321 = vunpack.c.l.b16 %v853
    %v1322 = vunpack.c.l.b16 %v854
    %v1323 = vunpack.c.l.b16 %v855
    %v1324 = vunpack.c.l.b16 %v856
    %v1325 = vunpack.c.l.b16 %v857
    %v1326 = vunpack.c.l.b16 %v858
    %v1327 = vunpack.c.l.b16 %v859
    %v1328 = vunpack.c.l.b16 %v860
    %v1329 = vunpack.c.l.b16 %v861
    %v1330 = vpack.c.b16 %v1299, %v1298
    %v1331 = vpack.c.b16 %v1301, %v1300
    %v1332 = vpack.c.b16 %v1303, %v1302
    %v1333 = vpack.c.b16 %v1305, %v1304
    %v1334 = vpack.c.b16 %v1307, %v1306
    %v1335 = vpack.c.b16 %v1309, %v1308
    %v1336 = vpack.c.b16 %v1311, %v1310
    %v1337 = vpack.c.b16 %v1313, %v1312
    %v1338 = vpack.c.b16 %v1315, %v1314
    %v1339 = vpack.c.b16 %v1317, %v1316
    %v1340 = vpack.c.b16 %v1319, %v1318
    %v1341 = vpack.c.b16 %v1321, %v1320
    %v1342 = vpack.c.b16 %v1323, %v1322
    %v1343 = vpack.c.b16 %v1325, %v1324
    %v1344 = vpack.c.b16 %v1327, %v1326
    %v1345 = vpack.c.b16 %v1329, %v1328
    %1362 = vmatpush.bf16.msra.mxu0 %v1337
    %1363 = vmatpush.bf16.msra.mxu0 %v1336
    %1364 = vmatpush.bf16.msra.mxu0 %v1335
    %1365 = vmatpush.bf16.msra.mxu0 %v1334
    %1366 = vmatpush.bf16.msra.mxu0 %v1333
    %1367 = vmatpush.bf16.msra.mxu0 %v1332
    %1368 = vmatpush.bf16.msra.mxu0 %v1331
    %1369 = vmatpush.bf16.msra.mxu0 %v1330
    %1370 = vmatmul.bf16.gmra.mxu0 %v782
    %v1371 = vpop.f32.mrf.mxu0
    %v1372 = vadd.f32 0.0, %v1371
    %v1373 = vpop.f32.mrf.mxu0
    %v1374 = vadd.f32 0.0, %v1373
    %1375 = vmatmul.bf16.gmra.mxu0 %v784
    %v1376 = vpop.f32.mrf.mxu0
    %v1377 = vadd.f32 0.0, %v1376
    %v1378 = vpop.f32.mrf.mxu0
    %v1379 = vadd.f32 0.0, %v1378
    %1380 = vmatmul.bf16.gmra.mxu0 %v786
    %v1381 = vpop.f32.mrf.mxu0
    %v1382 = vadd.f32 0.0, %v1381
    %v1383 = vpop.f32.mrf.mxu0
    %v1384 = vadd.f32 0.0, %v1383
    %1385 = vmatmul.bf16.gmra.mxu0 %v788
    %v1386 = vpop.f32.mrf.mxu0
    %v1387 = vadd.f32 0.0, %v1386
    %v1388 = vpop.f32.mrf.mxu0
    %v1389 = vadd.f32 0.0, %v1388
    %1390 = vmatmul.bf16.gmra.mxu0 %v790
    %v1391 = vpop.f32.mrf.mxu0
    %v1392 = vadd.f32 0.0, %v1391
    %v1393 = vpop.f32.mrf.mxu0
    %v1394 = vadd.f32 0.0, %v1393
    %1395 = vmatmul.bf16.gmra.mxu0 %v792
    %v1396 = vpop.f32.mrf.mxu0
    %v1397 = vadd.f32 0.0, %v1396
    %v1398 = vpop.f32.mrf.mxu0
    %v1399 = vadd.f32 0.0, %v1398
    %1400 = vmatmul.bf16.gmra.mxu0 %v794
    %v1401 = vpop.f32.mrf.mxu0
    %v1402 = vadd.f32 0.0, %v1401
    %v1403 = vpop.f32.mrf.mxu0
    %v1404 = vadd.f32 0.0, %v1403
    %1405 = vmatmul.bf16.gmra.mxu0 %v796
    %v1406 = vpop.f32.mrf.mxu0
    %v1407 = vadd.f32 0.0, %v1406
    %v1408 = vpop.f32.mrf.mxu0
    %v1409 = vadd.f32 0.0, %v1408
    %1410 = vdwg.mxu0
    %1411 = vmatpush.bf16.msra.mxu0 %v1345
    %1412 = vmatpush.bf16.msra.mxu0 %v1344
    %1413 = vmatpush.bf16.msra.mxu0 %v1343
    %1414 = vmatpush.bf16.msra.mxu0 %v1342
    %1415 = vmatpush.bf16.msra.mxu0 %v1341
    %1416 = vmatpush.bf16.msra.mxu0 %v1340
    %1417 = vmatpush.bf16.msra.mxu0 %v1339
    %1418 = vmatpush.bf16.msra.mxu0 %v1338
    %1419 = vmatmul.bf16.gmra.mxu0 %v783
    %v1420 = vpop.f32.mrf.mxu0
    %v1421 = vadd.f32 %v1372, %v1420
    %v1422 = vpop.f32.mrf.mxu0
    %v1423 = vadd.f32 %v1374, %v1422
    %1424 = vmatmul.bf16.gmra.mxu0 %v785
    %v1425 = vpop.f32.mrf.mxu0
    %v1426 = vadd.f32 %v1377, %v1425
    %v1427 = vpop.f32.mrf.mxu0
    %v1428 = vadd.f32 %v1379, %v1427
    %1429 = vmatmul.bf16.gmra.mxu0 %v787
    %v1430 = vpop.f32.mrf.mxu0
    %v1431 = vadd.f32 %v1382, %v1430
    %v1432 = vpop.f32.mrf.mxu0
    %v1433 = vadd.f32 %v1384, %v1432
    %1434 = vmatmul.bf16.gmra.mxu0 %v789
    %v1435 = vpop.f32.mrf.mxu0
    %v1436 = vadd.f32 %v1387, %v1435
    %v1437 = vpop.f32.mrf.mxu0
    %v1438 = vadd.f32 %v1389, %v1437
    %1439 = vmatmul.bf16.gmra.mxu0 %v791
    %v1440 = vpop.f32.mrf.mxu0
    %v1441 = vadd.f32 %v1392, %v1440
    %v1442 = vpop.f32.mrf.mxu0
    %v1443 = vadd.f32 %v1394, %v1442
    %1444 = vmatmul.bf16.gmra.mxu0 %v793
    %v1445 = vpop.f32.mrf.mxu0
    %v1446 = vadd.f32 %v1397, %v1445
    %v1447 = vpop.f32.mrf.mxu0
    %v1448 = vadd.f32 %v1399, %v1447
    %1449 = vmatmul.bf16.gmra.mxu0 %v795
    %v1450 = vpop.f32.mrf.mxu0
    %v1451 = vadd.f32 %v1402, %v1450
    %v1452 = vpop.f32.mrf.mxu0
    %v1453 = vadd.f32 %v1404, %v1452
    %1454 = vmatmul.bf16.gmra.mxu0 %v797
    %v1455 = vpop.f32.mrf.mxu0
    %v1456 = vadd.f32 %v1407, %v1455
    %v1457 = vpop.f32.mrf.mxu0
    %v1458 = vadd.f32 %v1409, %v1457
    %1459 = vdwg.mxu0
    %v1460 = vadd.f32 %v1250, %v1421
    %v1461 = vadd.f32 %v1251, %v1423
    %v1462 = vadd.f32 %v1252, %v1426
    %v1463 = vadd.f32 %v1253, %v1428
    %v1464 = vadd.f32 %v1254, %v1431
    %v1465 = vadd.f32 %v1255, %v1433
    %v1466 = vadd.f32 %v1256, %v1436
    %v1467 = vadd.f32 %v1257, %v1438
    %v1468 = vadd.f32 %v1258, %v1441
    %v1469 = vadd.f32 %v1259, %v1443
    %v1470 = vadd.f32 %v1260, %v1446
    %v1471 = vadd.f32 %v1261, %v1448
    %v1472 = vadd.f32 %v1262, %v1451
    %v1473 = vadd.f32 %v1263, %v1453
    %v1474 = vadd.f32 %v1264, %v1456
    %v1475 = vadd.f32 %v1265, %v1458
    %1476 = vst [vmem:[#allocation3] sm:$0xff] %v1460
    %1477 = vst [vmem:[#allocation3 + $0x8] sm:$0xff] %v1461
    %1478 = vst [vmem:[#allocation3 + $0x10] sm:$0xff] %v1462
    %1479 = vst [vmem:[#allocation3 + $0x18] sm:$0xff] %v1463
    %1480 = vst [vmem:[#allocation3 + $0x20] sm:$0xff] %v1464
    %1481 = vst [vmem:[#allocation3 + $0x28] sm:$0xff] %v1465
    %1482 = vst [vmem:[#allocation3 + $0x30] sm:$0xff] %v1466
    %1483 = vst [vmem:[#allocation3 + $0x38] sm:$0xff] %v1467
    %1484 = vst [vmem:[#allocation3 + $0x40] sm:$0xff] %v1468
    %1485 = vst [vmem:[#allocation3 + $0x48] sm:$0xff] %v1469
    %1486 = vst [vmem:[#allocation3 + $0x50] sm:$0xff] %v1470
    %1487 = vst [vmem:[#allocation3 + $0x58] sm:$0xff] %v1471
    %1488 = vst [vmem:[#allocation3 + $0x60] sm:$0xff] %v1472
    %1489 = vst [vmem:[#allocation3 + $0x68] sm:$0xff] %v1473
    %1490 = vst [vmem:[#allocation3 + $0x70] sm:$0xff] %v1474
    %1491 = vst [vmem:[#allocation3 + $0x78] sm:$0xff] %v1475
    // Predicated region
    $region74: #{tpu_custom_call.1} parent=1 // pred_check
      %p1492 = pneg %p139
    $region75: #{tpu_custom_call.1} parent=1 // pred_check_branch
      %1494 = sbr.rel (%p1492) target = $region77
    $region76: #{tpu_custom_call.1} parent=1 // pred_region
      %v1495 = vld [vmem:[#allocation2] sm:$0xff]
      %v1496 = vld [vmem:[#allocation2 + $0x8] sm:$0xff]
      %v1497 = vld [vmem:[#allocation2 + $0x10] sm:$0xff]
      %v1498 = vld [vmem:[#allocation2 + $0x18] sm:$0xff]
      %v1499 = vld [vmem:[#allocation2 + $0x20] sm:$0xff]
      %v1500 = vld [vmem:[#allocation2 + $0x28] sm:$0xff]
      %v1501 = vld [vmem:[#allocation2 + $0x30] sm:$0xff]
      %v1502 = vld [vmem:[#allocation2 + $0x38] sm:$0xff]
      %v1503 = vld [vmem:[#allocation2 + $0x40] sm:$0xff]
      %v1504 = vld [vmem:[#allocation2 + $0x48] sm:$0xff]
      %v1505 = vld [vmem:[#allocation2 + $0x50] sm:$0xff]
      %v1506 = vld [vmem:[#allocation2 + $0x58] sm:$0xff]
      %v1507 = vld [vmem:[#allocation2 + $0x60] sm:$0xff]
      %v1508 = vld [vmem:[#allocation2 + $0x68] sm:$0xff]
      %v1509 = vld [vmem:[#allocation2 + $0x70] sm:$0xff]
      %v1510 = vld [vmem:[#allocation2 + $0x78] sm:$0xff]
      %v1511 = vld [vmem:[#allocation3] sm:$0xff]
      %v1512 = vld [vmem:[#allocation3 + $0x8] sm:$0xff]
      %v1513 = vld [vmem:[#allocation3 + $0x10] sm:$0xff]
      %v1514 = vld [vmem:[#allocation3 + $0x18] sm:$0xff]
      %v1515 = vld [vmem:[#allocation3 + $0x20] sm:$0xff]
      %v1516 = vld [vmem:[#allocation3 + $0x28] sm:$0xff]
      %v1517 = vld [vmem:[#allocation3 + $0x30] sm:$0xff]
      %v1518 = vld [vmem:[#allocation3 + $0x38] sm:$0xff]
      %v1519 = vld [vmem:[#allocation3 + $0x40] sm:$0xff]
      %v1520 = vld [vmem:[#allocation3 + $0x48] sm:$0xff]
      %v1521 = vld [vmem:[#allocation3 + $0x50] sm:$0xff]
      %v1522 = vld [vmem:[#allocation3 + $0x58] sm:$0xff]
      %v1523 = vld [vmem:[#allocation3 + $0x60] sm:$0xff]
      %v1524 = vld [vmem:[#allocation3 + $0x68] sm:$0xff]
      %v1525 = vld [vmem:[#allocation3 + $0x70] sm:$0xff]
      %v1526 = vld [vmem:[#allocation3 + $0x78] sm:$0xff]
      %v1527 = vld [vmem:[#allocation4] sm:$0xff]
      %v1528 = vld [vmem:[#allocation4 + $0x8] sm:$0xff]
      %v1529 = vld [vmem:[#allocation4 + $0x10] sm:$0xff]
      %v1530 = vld [vmem:[#allocation4 + $0x18] sm:$0xff]
      %v1531 = vld [vmem:[#allocation4 + $0x20] sm:$0xff]
      %v1532 = vld [vmem:[#allocation4 + $0x28] sm:$0xff]
      %v1533 = vld [vmem:[#allocation4 + $0x30] sm:$0xff]
      %v1534 = vld [vmem:[#allocation4 + $0x38] sm:$0xff]
      %v1535 = vld [vmem:[#allocation4 + $0x40] sm:$0xff]
      %v1536 = vld [vmem:[#allocation4 + $0x48] sm:$0xff]
      %v1537 = vld [vmem:[#allocation4 + $0x50] sm:$0xff]
      %v1538 = vld [vmem:[#allocation4 + $0x58] sm:$0xff]
      %v1539 = vld [vmem:[#allocation4 + $0x60] sm:$0xff]
      %v1540 = vld [vmem:[#allocation4 + $0x68] sm:$0xff]
      %v1541 = vld [vmem:[#allocation4 + $0x70] sm:$0xff]
      %v1542 = vld [vmem:[#allocation4 + $0x78] sm:$0xff]
      %v1543 = vld [vmem:[#allocation14] sm:$0xff]
      %v1544 = vld [vmem:[#allocation14 + $0x8] sm:$0xff]
      %v1545 = vld [vmem:[#allocation14 + $0x10] sm:$0xff]
      %v1546 = vld [vmem:[#allocation14 + $0x18] sm:$0xff]
      %v1547 = vld [vmem:[#allocation14 + $0x20] sm:$0xff]
      %v1548 = vld [vmem:[#allocation14 + $0x28] sm:$0xff]
      %v1549 = vld [vmem:[#allocation14 + $0x30] sm:$0xff]
      %v1550 = vld [vmem:[#allocation14 + $0x38] sm:$0xff]
      %v1551 = vld [vmem:[#allocation14 + $0x40] sm:$0xff]
      %v1552 = vld [vmem:[#allocation14 + $0x48] sm:$0xff]
      %v1553 = vld [vmem:[#allocation14 + $0x50] sm:$0xff]
      %v1554 = vld [vmem:[#allocation14 + $0x58] sm:$0xff]
      %v1555 = vld [vmem:[#allocation14 + $0x60] sm:$0xff]
      %v1556 = vld [vmem:[#allocation14 + $0x68] sm:$0xff]
      %v1557 = vld [vmem:[#allocation14 + $0x70] sm:$0xff]
      %v1558 = vld [vmem:[#allocation14 + $0x78] sm:$0xff]
      %v1559 = vld [vmem:[#allocation14 + $0x80] sm:$0xff]
      %v1560 = vld [vmem:[#allocation14 + $0x88] sm:$0xff]
      %v1561 = vld [vmem:[#allocation14 + $0x90] sm:$0xff]
      %v1562 = vld [vmem:[#allocation14 + $0x98] sm:$0xff]
      %v1563 = vld [vmem:[#allocation14 + $0xa0] sm:$0xff]
      %v1564 = vld [vmem:[#allocation14 + $0xa8] sm:$0xff]
      %v1565 = vld [vmem:[#allocation14 + $0xb0] sm:$0xff]
      %v1566 = vld [vmem:[#allocation14 + $0xb8] sm:$0xff]
      %v1567 = vld [vmem:[#allocation14 + $0xc0] sm:$0xff]
      %v1568 = vld [vmem:[#allocation14 + $0xc8] sm:$0xff]
      %v1569 = vld [vmem:[#allocation14 + $0xd0] sm:$0xff]
      %v1570 = vld [vmem:[#allocation14 + $0xd8] sm:$0xff]
      %v1571 = vld [vmem:[#allocation14 + $0xe0] sm:$0xff]
      %v1572 = vld [vmem:[#allocation14 + $0xe8] sm:$0xff]
      %v1573 = vld [vmem:[#allocation14 + $0xf0] sm:$0xff]
      %v1574 = vld [vmem:[#allocation14 + $0xf8] sm:$0xff]
      %v1575 = vld [vmem:[#allocation14 + $0x100] sm:$0xff]
      %v1576 = vld [vmem:[#allocation14 + $0x108] sm:$0xff]
      %v1577 = vld [vmem:[#allocation14 + $0x110] sm:$0xff]
      %v1578 = vld [vmem:[#allocation14 + $0x118] sm:$0xff]
      %v1579 = vld [vmem:[#allocation14 + $0x120] sm:$0xff]
      %v1580 = vld [vmem:[#allocation14 + $0x128] sm:$0xff]
      %v1581 = vld [vmem:[#allocation14 + $0x130] sm:$0xff]
      %v1582 = vld [vmem:[#allocation14 + $0x138] sm:$0xff]
      %v1583 = vld [vmem:[#allocation14 + $0x140] sm:$0xff]
      %v1584 = vld [vmem:[#allocation14 + $0x148] sm:$0xff]
      %v1585 = vld [vmem:[#allocation14 + $0x150] sm:$0xff]
      %v1586 = vld [vmem:[#allocation14 + $0x158] sm:$0xff]
      %v1587 = vld [vmem:[#allocation14 + $0x160] sm:$0xff]
      %v1588 = vld [vmem:[#allocation14 + $0x168] sm:$0xff]
      %v1589 = vld [vmem:[#allocation14 + $0x170] sm:$0xff]
      %v1590 = vld [vmem:[#allocation14 + $0x178] sm:$0xff]
      %v1591 = vld [vmem:[%s7] sm:$0x1]
      %v1593 = vperm.slane %v1591, 0
      %1595 = vmatpush.msra.mxu0 %v1558
      %1596 = vmatpush.msra.mxu0 %v1557
      %1597 = vmatpush.msra.mxu0 %v1556
      %1598 = vmatpush.msra.mxu0 %v1555
      %1599 = vmatpush.msra.mxu0 %v1554
      %1600 = vmatpush.msra.mxu0 %v1553
      %1601 = vmatpush.msra.mxu0 %v1552
      %1602 = vmatpush.msra.mxu0 %v1551
      %1603 = vmatpush.msra.mxu0 %v1550
      %1604 = vmatpush.msra.mxu0 %v1549
      %1605 = vmatpush.msra.mxu0 %v1548
      %1606 = vmatpush.msra.mxu0 %v1547
      %1607 = vmatpush.msra.mxu0 %v1546
      %1608 = vmatpush.msra.mxu0 %v1545
      %1609 = vmatpush.msra.mxu0 %v1544
      %1610 = vmatpush.msra.mxu0 %v1543
      %1611 = vmatmul.f32.gmra.mxu0 %v1495
      %v1612 = vpop.f32.mrf.mxu0
      %v1613 = vadd.f32 %v1593, %v1612
      %1614 = vmatmul.f32.gmra.mxu0 %v1496
      %v1615 = vpop.f32.mrf.mxu0
      %v1616 = vadd.f32 %v1593, %v1615
      %1617 = vmatmul.f32.gmra.mxu0 %v1497
      %v1618 = vpop.f32.mrf.mxu0
      %v1619 = vadd.f32 %v1593, %v1618
      %1620 = vmatmul.f32.gmra.mxu0 %v1498
      %v1621 = vpop.f32.mrf.mxu0
      %v1622 = vadd.f32 %v1593, %v1621
      %1623 = vmatmul.f32.gmra.mxu0 %v1499
      %v1624 = vpop.f32.mrf.mxu0
      %v1625 = vadd.f32 %v1593, %v1624
      %1626 = vmatmul.f32.gmra.mxu0 %v1500
      %v1627 = vpop.f32.mrf.mxu0
      %v1628 = vadd.f32 %v1593, %v1627
      %1629 = vmatmul.f32.gmra.mxu0 %v1501
      %v1630 = vpop.f32.mrf.mxu0
      %v1631 = vadd.f32 %v1593, %v1630
      %1632 = vmatmul.f32.gmra.mxu0 %v1502
      %v1633 = vpop.f32.mrf.mxu0
      %v1634 = vadd.f32 %v1593, %v1633
      %1635 = vmatmul.f32.gmra.mxu0 %v1503
      %v1636 = vpop.f32.mrf.mxu0
      %v1637 = vadd.f32 %v1593, %v1636
      %1638 = vmatmul.f32.gmra.mxu0 %v1504
      %v1639 = vpop.f32.mrf.mxu0
      %v1640 = vadd.f32 %v1593, %v1639
      %1641 = vmatmul.f32.gmra.mxu0 %v1505
      %v1642 = vpop.f32.mrf.mxu0
      %v1643 = vadd.f32 %v1593, %v1642
      %1644 = vmatmul.f32.gmra.mxu0 %v1506
      %v1645 = vpop.f32.mrf.mxu0
      %v1646 = vadd.f32 %v1593, %v1645
      %1647 = vmatmul.f32.gmra.mxu0 %v1507
      %v1648 = vpop.f32.mrf.mxu0
      %v1649 = vadd.f32 %v1593, %v1648
      %1650 = vmatmul.f32.gmra.mxu0 %v1508
      %v1651 = vpop.f32.mrf.mxu0
      %v1652 = vadd.f32 %v1593, %v1651
      %1653 = vmatmul.f32.gmra.mxu0 %v1509
      %v1654 = vpop.f32.mrf.mxu0
      %v1655 = vadd.f32 %v1593, %v1654
      %1656 = vmatmul.f32.gmra.mxu0 %v1510
      %v1657 = vpop.f32.mrf.mxu0
      %v1658 = vadd.f32 %v1593, %v1657
      %1659 = vdwg.mxu0
      %1660 = vmatpush.msra.mxu0 %v1574
      %1661 = vmatpush.msra.mxu0 %v1573
      %1662 = vmatpush.msra.mxu0 %v1572
      %1663 = vmatpush.msra.mxu0 %v1571
      %1664 = vmatpush.msra.mxu0 %v1570
      %1665 = vmatpush.msra.mxu0 %v1569
      %1666 = vmatpush.msra.mxu0 %v1568
      %1667 = vmatpush.msra.mxu0 %v1567
      %1668 = vmatpush.msra.mxu0 %v1566
      %1669 = vmatpush.msra.mxu0 %v1565
      %1670 = vmatpush.msra.mxu0 %v1564
      %1671 = vmatpush.msra.mxu0 %v1563
      %1672 = vmatpush.msra.mxu0 %v1562
      %1673 = vmatpush.msra.mxu0 %v1561
      %1674 = vmatpush.msra.mxu0 %v1560
      %1675 = vmatpush.msra.mxu0 %v1559
      %1676 = vmatmul.f32.gmra.mxu0 %v1511
      %v1677 = vpop.f32.mrf.mxu0
      %v1678 = vadd.f32 %v1613, %v1677
      %1679 = vmatmul.f32.gmra.mxu0 %v1512
      %v1680 = vpop.f32.mrf.mxu0
      %v1681 = vadd.f32 %v1616, %v1680
      %1682 = vmatmul.f32.gmra.mxu0 %v1513
      %v1683 = vpop.f32.mrf.mxu0
      %v1684 = vadd.f32 %v1619, %v1683
      %1685 = vmatmul.f32.gmra.mxu0 %v1514
      %v1686 = vpop.f32.mrf.mxu0
      %v1687 = vadd.f32 %v1622, %v1686
      %1688 = vmatmul.f32.gmra.mxu0 %v1515
      %v1689 = vpop.f32.mrf.mxu0
      %v1690 = vadd.f32 %v1625, %v1689
      %1691 = vmatmul.f32.gmra.mxu0 %v1516
      %v1692 = vpop.f32.mrf.mxu0
      %v1693 = vadd.f32 %v1628, %v1692
      %1694 = vmatmul.f32.gmra.mxu0 %v1517
      %v1695 = vpop.f32.mrf.mxu0
      %v1696 = vadd.f32 %v1631, %v1695
      %1697 = vmatmul.f32.gmra.mxu0 %v1518
      %v1698 = vpop.f32.mrf.mxu0
      %v1699 = vadd.f32 %v1634, %v1698
      %1700 = vmatmul.f32.gmra.mxu0 %v1519
      %v1701 = vpop.f32.mrf.mxu0
      %v1702 = vadd.f32 %v1637, %v1701
      %1703 = vmatmul.f32.gmra.mxu0 %v1520
      %v1704 = vpop.f32.mrf.mxu0
      %v1705 = vadd.f32 %v1640, %v1704
      %1706 = vmatmul.f32.gmra.mxu0 %v1521
      %v1707 = vpop.f32.mrf.mxu0
      %v1708 = vadd.f32 %v1643, %v1707
      %1709 = vmatmul.f32.gmra.mxu0 %v1522
      %v1710 = vpop.f32.mrf.mxu0
      %v1711 = vadd.f32 %v1646, %v1710
      %1712 = vmatmul.f32.gmra.mxu0 %v1523
      %v1713 = vpop.f32.mrf.mxu0
      %v1714 = vadd.f32 %v1649, %v1713
      %1715 = vmatmul.f32.gmra.mxu0 %v1524
      %v1716 = vpop.f32.mrf.mxu0
      %v1717 = vadd.f32 %v1652, %v1716
      %1718 = vmatmul.f32.gmra.mxu0 %v1525
      %v1719 = vpop.f32.mrf.mxu0
      %v1720 = vadd.f32 %v1655, %v1719
      %1721 = vmatmul.f32.gmra.mxu0 %v1526
      %v1722 = vpop.f32.mrf.mxu0
      %v1723 = vadd.f32 %v1658, %v1722
      %1724 = vdwg.mxu0
      %1725 = vmatpush.msra.mxu0 %v1590
      %1726 = vmatpush.msra.mxu0 %v1589
      %1727 = vmatpush.msra.mxu0 %v1588
      %1728 = vmatpush.msra.mxu0 %v1587
      %1729 = vmatpush.msra.mxu0 %v1586
      %1730 = vmatpush.msra.mxu0 %v1585
      %1731 = vmatpush.msra.mxu0 %v1584
      %1732 = vmatpush.msra.mxu0 %v1583
      %1733 = vmatpush.msra.mxu0 %v1582
      %1734 = vmatpush.msra.mxu0 %v1581
      %1735 = vmatpush.msra.mxu0 %v1580
      %1736 = vmatpush.msra.mxu0 %v1579
      %1737 = vmatpush.msra.mxu0 %v1578
      %1738 = vmatpush.msra.mxu0 %v1577
      %1739 = vmatpush.msra.mxu0 %v1576
      %1740 = vmatpush.msra.mxu0 %v1575
      %1741 = vmatmul.f32.gmra.mxu0 %v1527
      %v1742 = vpop.f32.mrf.mxu0
      %v1743 = vadd.f32 %v1678, %v1742
      %1744 = vmatmul.f32.gmra.mxu0 %v1528
      %v1745 = vpop.f32.mrf.mxu0
      %v1746 = vadd.f32 %v1681, %v1745
      %1747 = vmatmul.f32.gmra.mxu0 %v1529
      %v1748 = vpop.f32.mrf.mxu0
      %v1749 = vadd.f32 %v1684, %v1748
      %1750 = vmatmul.f32.gmra.mxu0 %v1530
      %v1751 = vpop.f32.mrf.mxu0
      %v1752 = vadd.f32 %v1687, %v1751
      %1753 = vmatmul.f32.gmra.mxu0 %v1531
      %v1754 = vpop.f32.mrf.mxu0
      %v1755 = vadd.f32 %v1690, %v1754
      %1756 = vmatmul.f32.gmra.mxu0 %v1532
      %v1757 = vpop.f32.mrf.mxu0
      %v1758 = vadd.f32 %v1693, %v1757
      %1759 = vmatmul.f32.gmra.mxu0 %v1533
      %v1760 = vpop.f32.mrf.mxu0
      %v1761 = vadd.f32 %v1696, %v1760
      %1762 = vmatmul.f32.gmra.mxu0 %v1534
      %v1763 = vpop.f32.mrf.mxu0
      %v1764 = vadd.f32 %v1699, %v1763
      %1765 = vmatmul.f32.gmra.mxu0 %v1535
      %v1766 = vpop.f32.mrf.mxu0
      %v1767 = vadd.f32 %v1702, %v1766
      %1768 = vmatmul.f32.gmra.mxu0 %v1536
      %v1769 = vpop.f32.mrf.mxu0
      %v1770 = vadd.f32 %v1705, %v1769
      %1771 = vmatmul.f32.gmra.mxu0 %v1537
      %v1772 = vpop.f32.mrf.mxu0
      %v1773 = vadd.f32 %v1708, %v1772
      %1774 = vmatmul.f32.gmra.mxu0 %v1538
      %v1775 = vpop.f32.mrf.mxu0
      %v1776 = vadd.f32 %v1711, %v1775
      %1777 = vmatmul.f32.gmra.mxu0 %v1539
      %v1778 = vpop.f32.mrf.mxu0
      %v1779 = vadd.f32 %v1714, %v1778
      %1780 = vmatmul.f32.gmra.mxu0 %v1540
      %v1781 = vpop.f32.mrf.mxu0
      %v1782 = vadd.f32 %v1717, %v1781
      %1783 = vmatmul.f32.gmra.mxu0 %v1541
      %v1784 = vpop.f32.mrf.mxu0
      %v1785 = vadd.f32 %v1720, %v1784
      %1786 = vmatmul.f32.gmra.mxu0 %v1542
      %v1787 = vpop.f32.mrf.mxu0
      %v1788 = vadd.f32 %v1723, %v1787
      %1789 = vdwg.mxu0
      %v1790 = vmax.f32 %v1743, 0.0
      %v1791 = vmax.f32 %v1746, 0.0
      %v1792 = vmax.f32 %v1749, 0.0
      %v1793 = vmax.f32 %v1752, 0.0
      %v1794 = vmax.f32 %v1755, 0.0
      %v1795 = vmax.f32 %v1758, 0.0
      %v1796 = vmax.f32 %v1761, 0.0
      %v1797 = vmax.f32 %v1764, 0.0
      %v1798 = vmax.f32 %v1767, 0.0
      %v1799 = vmax.f32 %v1770, 0.0
      %v1800 = vmax.f32 %v1773, 0.0
      %v1801 = vmax.f32 %v1776, 0.0
      %v1802 = vmax.f32 %v1779, 0.0
      %v1803 = vmax.f32 %v1782, 0.0
      %v1804 = vmax.f32 %v1785, 0.0
      %v1805 = vmax.f32 %v1788, 0.0
      %v1806 = vld [vmem:[#allocation16] sm:$0xff]
      %v1807 = vld [vmem:[#allocation16 + $0x8] sm:$0xff]
      %v1808 = vld [vmem:[#allocation16 + $0x10] sm:$0xff]
      %v1809 = vld [vmem:[#allocation16 + $0x18] sm:$0xff]
      %v1810 = vld [vmem:[#allocation16 + $0x20] sm:$0xff]
      %v1811 = vld [vmem:[#allocation16 + $0x28] sm:$0xff]
      %v1812 = vld [vmem:[#allocation16 + $0x30] sm:$0xff]
      %v1813 = vld [vmem:[#allocation16 + $0x38] sm:$0xff]
      %v1814 = vld [vmem:[#allocation16 + $0x40] sm:$0xff]
      %v1815 = vld [vmem:[#allocation16 + $0x48] sm:$0xff]
      %v1816 = vld [vmem:[#allocation16 + $0x50] sm:$0xff]
      %v1817 = vld [vmem:[#allocation16 + $0x58] sm:$0xff]
      %v1818 = vld [vmem:[#allocation16 + $0x60] sm:$0xff]
      %v1819 = vld [vmem:[#allocation16 + $0x68] sm:$0xff]
      %v1820 = vld [vmem:[#allocation16 + $0x70] sm:$0xff]
      %v1821 = vld [vmem:[#allocation16 + $0x78] sm:$0xff]
      %v1822 = vld [vmem:[%s9] sm:$0x1]
      %v1824 = vperm.slane %v1822, 0
      %1826 = vmatpush.msra.mxu0 %v1821
      %1827 = vmatpush.msra.mxu0 %v1820
      %1828 = vmatpush.msra.mxu0 %v1819
      %1829 = vmatpush.msra.mxu0 %v1818
      %1830 = vmatpush.msra.mxu0 %v1817
      %1831 = vmatpush.msra.mxu0 %v1816
      %1832 = vmatpush.msra.mxu0 %v1815
      %1833 = vmatpush.msra.mxu0 %v1814
      %1834 = vmatpush.msra.mxu0 %v1813
      %1835 = vmatpush.msra.mxu0 %v1812
      %1836 = vmatpush.msra.mxu0 %v1811
      %1837 = vmatpush.msra.mxu0 %v1810
      %1838 = vmatpush.msra.mxu0 %v1809
      %1839 = vmatpush.msra.mxu0 %v1808
      %1840 = vmatpush.msra.mxu0 %v1807
      %1841 = vmatpush.msra.mxu0 %v1806
      %1842 = vmatmul.f32.gmra.mxu0 %v1790
      %v1843 = vpop.f32.mrf.mxu0
      %v1844 = vadd.f32 %v1824, %v1843
      %1845 = vmatmul.f32.gmra.mxu0 %v1791
      %v1846 = vpop.f32.mrf.mxu0
      %v1847 = vadd.f32 %v1824, %v1846
      %1848 = vmatmul.f32.gmra.mxu0 %v1792
      %v1849 = vpop.f32.mrf.mxu0
      %v1850 = vadd.f32 %v1824, %v1849
      %1851 = vmatmul.f32.gmra.mxu0 %v1793
      %v1852 = vpop.f32.mrf.mxu0
      %v1853 = vadd.f32 %v1824, %v1852
      %1854 = vmatmul.f32.gmra.mxu0 %v1794
      %v1855 = vpop.f32.mrf.mxu0
      %v1856 = vadd.f32 %v1824, %v1855
      %1857 = vmatmul.f32.gmra.mxu0 %v1795
      %v1858 = vpop.f32.mrf.mxu0
      %v1859 = vadd.f32 %v1824, %v1858
      %1860 = vmatmul.f32.gmra.mxu0 %v1796
      %v1861 = vpop.f32.mrf.mxu0
      %v1862 = vadd.f32 %v1824, %v1861
      %1863 = vmatmul.f32.gmra.mxu0 %v1797
      %v1864 = vpop.f32.mrf.mxu0
      %v1865 = vadd.f32 %v1824, %v1864
      %1866 = vmatmul.f32.gmra.mxu0 %v1798
      %v1867 = vpop.f32.mrf.mxu0
      %v1868 = vadd.f32 %v1824, %v1867
      %1869 = vmatmul.f32.gmra.mxu0 %v1799
      %v1870 = vpop.f32.mrf.mxu0
      %v1871 = vadd.f32 %v1824, %v1870
      %1872 = vmatmul.f32.gmra.mxu0 %v1800
      %v1873 = vpop.f32.mrf.mxu0
      %v1874 = vadd.f32 %v1824, %v1873
      %1875 = vmatmul.f32.gmra.mxu0 %v1801
      %v1876 = vpop.f32.mrf.mxu0
      %v1877 = vadd.f32 %v1824, %v1876
      %1878 = vmatmul.f32.gmra.mxu0 %v1802
      %v1879 = vpop.f32.mrf.mxu0
      %v1880 = vadd.f32 %v1824, %v1879
      %1881 = vmatmul.f32.gmra.mxu0 %v1803
      %v1882 = vpop.f32.mrf.mxu0
      %v1883 = vadd.f32 %v1824, %v1882
      %1884 = vmatmul.f32.gmra.mxu0 %v1804
      %v1885 = vpop.f32.mrf.mxu0
      %v1886 = vadd.f32 %v1824, %v1885
      %1887 = vmatmul.f32.gmra.mxu0 %v1805
      %v1888 = vpop.f32.mrf.mxu0
      %v1889 = vadd.f32 %v1824, %v1888
      %1890 = vdwg.mxu0
      %1891 = vst [vmem:[#allocation17] sm:$0xff] %v1844
      %1892 = vst [vmem:[#allocation17 + $0x8] sm:$0xff] %v1847
      %1893 = vst [vmem:[#allocation17 + $0x10] sm:$0xff] %v1850
      %1894 = vst [vmem:[#allocation17 + $0x18] sm:$0xff] %v1853
      %1895 = vst [vmem:[#allocation17 + $0x20] sm:$0xff] %v1856
      %1896 = vst [vmem:[#allocation17 + $0x28] sm:$0xff] %v1859
      %1897 = vst [vmem:[#allocation17 + $0x30] sm:$0xff] %v1862
      %1898 = vst [vmem:[#allocation17 + $0x38] sm:$0xff] %v1865
      %1899 = vst [vmem:[#allocation17 + $0x40] sm:$0xff] %v1868
      %1900 = vst [vmem:[#allocation17 + $0x48] sm:$0xff] %v1871
      %1901 = vst [vmem:[#allocation17 + $0x50] sm:$0xff] %v1874
      %1902 = vst [vmem:[#allocation17 + $0x58] sm:$0xff] %v1877
      %1903 = vst [vmem:[#allocation17 + $0x60] sm:$0xff] %v1880
      %1904 = vst [vmem:[#allocation17 + $0x68] sm:$0xff] %v1883
      %1905 = vst [vmem:[#allocation17 + $0x70] sm:$0xff] %v1886
      %1906 = vst [vmem:[#allocation17 + $0x78] sm:$0xff] %v1889
    $region77: #{tpu_custom_call.1} parent=1 // pred_fallthru
      _
    // Predicated region
    $region78: #{tpu_custom_call.1} parent=1 // pred_check
      _
    $region79: #{tpu_custom_call.1} parent=1 // pred_check_branch
      %1908 = sbr.rel (0) target = $region81
    $region80: #{tpu_custom_call.1} parent=1 // pred_region
      %1910 = vsyncadd [#allocation7], 0
      %s1911 = sshll.u32 [#allocation17], 4
      %s1912 = int_to_ptr.vmem [resolvable:$true] %s1911
      %s1913 = sshll.u32 %s10, 4
      %s1914 = int_to_ptr.hbm [resolvable:$true] %s1913
      %1919 = dma.vmem_to_hbm [thread:$0]  %s1912, 2048, %s1914, [#allocation7], 128, 128, 8
    $region81: #{tpu_custom_call.1} parent=1 // pred_fallthru
      _
    // Predicated region
    $region82: #{tpu_custom_call.1} parent=1 // pred_check
      _
    $region83: #{tpu_custom_call.1} parent=1 // pred_check_branch
      %1921 = sbr.rel (0) target = $region85
    $region84: #{tpu_custom_call.1} parent=1 // pred_region
      %1923 = dma.done [#allocation7], 2048
    $region85: #{tpu_custom_call.1} parent=1 // pred_fallthru
      _
    %1924 = vsyncpa [#allocation6], 1
    %1925 = vsyncpa [#allocation9], 1
    %1926 = vsyncpa [#allocation12], 1
    %1927 = vsyncpa [#allocation15], 1
    %1928 = vsyncpa [#allocation7], 1

</llo_original>
